<compile_context>
chip_gen: v6e
topology: v6e:2x2x1
jax: 0.10.0
libtpu: 0.0.40
codegen_flags: <defaults>
</compile_context>

<pallas_src>
import jax
import jax.numpy as jnp
from jax import lax
from jax.experimental import pallas as pl
from jax.experimental.pallas import tpu as pltpu

_VMEM_LIMIT_CACHE = None


def _vmem_limit_bytes():
    """~3/4 of physical VMEM, capped at 100 MiB (96 MiB v5e/v6e, 48 MiB v7x)."""
    global _VMEM_LIMIT_CACHE
    if _VMEM_LIMIT_CACHE is None:
        try:
            cap = getattr(pltpu.get_tpu_info(), "vmem_capacity_bytes", None)
            if cap is None:
                _VMEM_LIMIT_CACHE = 48 * 1024 * 1024
            else:
                _VMEM_LIMIT_CACHE = int(min(100 * 1024 * 1024, (cap * 3) // 4))
        except Exception:
            _VMEM_LIMIT_CACHE = 48 * 1024 * 1024
    return _VMEM_LIMIT_CACHE


def _vmem():
    return pl.BlockSpec(memory_space=pltpu.MemorySpace.VMEM)


def _bf16(a):
    return a.astype(jnp.bfloat16)


# ---------------------------------------------------------------------------
# Kernel 1: bidirectional GRU with length masking (pack_padded semantics).
#   - time-major (L, Bt, *) layout, batch grid ("parallel")
#   - one hoisted (L*Bt, D)@(D, 6H) input projection (bf16 scratch)
#   - one block-diagonal (Bt, 2H)@(2H, 6H) hidden matmul per step
#   - fwd/bwd recurrences interleaved in a single fori_loop
#   - per-step lane-dense stores into two bf16 outputs (no scratch / concat)
# ---------------------------------------------------------------------------
def bigru_kernel(x_ref, len_ref, wih_ref, bih_ref, whh_ref, bhh_ref,
                 outf_ref, outb_ref, hlast_ref, gi_s, h_s):
    L, Bt, D = x_ref.shape
    H = outf_ref.shape[2]
    H2, H3, H5, H6 = 2 * H, 3 * H, 5 * H, 6 * H

    # hoisted input projections for BOTH directions: one big-M MXU matmul
    x_flat = x_ref[...].reshape(L * Bt, D)                                  # bf16
    gi = jnp.dot(x_flat, wih_ref[...],
                 preferred_element_type=jnp.float32) + bih_ref[...]
    gi_s[...] = gi.astype(jnp.bfloat16).reshape(L, Bt, H6)

    # loop-invariant reads hoisted out of the recurrence
    w_hh = whh_ref[...]          # (2H, 6H) bf16, block-diagonal [fwd | bwd]
    b_hh = bhh_ref[...]          # (1, 6H) f32
    lens = len_ref[...]          # (Bt, 1) int32

    h_s[...] = jnp.zeros_like(h_s)           # [h_f | h_b] carry, f32

    def step(i, carry):
        t_b = L - 1 - i
        h_cat = h_s[...]                                     # (Bt, 2H) f32
        gh = jnp.dot(h_cat.astype(jnp.bfloat16), w_hh,
                     preferred_element_type=jnp.float32) + b_hh   # (Bt, 6H)
        gi_f = gi_s[i]                                       # (Bt, 6H) bf16
        gi_b = gi_s[t_b]

        # --- forward direction at t = i (gates live in columns [0:3H])
        h_f = h_cat[:, 0:H]
        rz_f = jax.nn.sigmoid(gi_f[:, 0:H2] + gh[:, 0:H2])   # fused r|z sigmoid
        n_f = jnp.tanh(gi_f[:, H2:H3] + rz_f[:, 0:H] * gh[:, H2:H3])
        z_f = rz_f[:, H:H2]
        h_new_f = (1.0 - z_f) * n_f + z_f * h_f
        mask_f = i < lens
        h_s[:, 0:H] = jnp.where(mask_f, h_new_f, h_f)
        outf_ref[i] = jnp.where(mask_f, h_new_f, 0.0).astype(outf_ref.dtype)

        # --- backward direction at t = L-1-i (gates in columns [3H:6H])
        h_b = h_cat[:, H:H2]
        rz_b = jax.nn.sigmoid(gi_b[:, H3:H5] + gh[:, H3:H5])
        n_b = jnp.tanh(gi_b[:, H5:H6] + rz_b[:, 0:H] * gh[:, H5:H6])
        z_b = rz_b[:, H:H2]
        h_new_b = (1.0 - z_b) * n_b + z_b * h_b
        mask_b = t_b < lens
        h_s[:, H:H2] = jnp.where(mask_b, h_new_b, h_b)
        outb_ref[t_b] = jnp.where(mask_b, h_new_b, 0.0).astype(outb_ref.dtype)
        return carry

    lax.fori_loop(0, L, step, 0)
    hlast_ref[...] = h_s[...]          # already [h_f | h_b]; no concat needed


def bigru(emb_tm, lengths, p, batch_tile=None):
    L, B, D = emb_tm.shape
    H = p["w_hh_f_t"].shape[0]
    Bt = B if batch_tile is None else batch_tile
    assert B % Bt == 0
    if Bt != B:
        assert Bt % 16 == 0, "batch tile must be a multiple of 16 (bf16 sublane)"
    lens = lengths.reshape(B, 1).astype(jnp.int32)

    # fused weight layouts (built once outside the kernel)
    w_ih_cat = jnp.concatenate([p["w_ih_f_t"], p["w_ih_b_t"]], axis=1)      # (D, 6H)
    b_ih_cat = jnp.concatenate([p["b_ih_f"], p["b_ih_b"]], axis=1)          # (1, 6H)
    w_hh_blk = jnp.zeros((2 * H, 6 * H), jnp.float32)
    w_hh_blk = w_hh_blk.at[:H, :3 * H].set(p["w_hh_f_t"])
    w_hh_blk = w_hh_blk.at[H:, 3 * H:].set(p["w_hh_b_t"])
    b_hh_cat = jnp.concatenate([p["b_hh_f"], p["b_hh_b"]], axis=1)          # (1, 6H)

    out_f, out_b, h_last = pl.pallas_call(
        bigru_kernel,
        out_shape=(
            jax.ShapeDtypeStruct((L, B, H), jnp.bfloat16),   # fwd outputs (bf16)
            jax.ShapeDtypeStruct((L, B, H), jnp.bfloat16),   # bwd outputs (bf16)
            jax.ShapeDtypeStruct((B, 2 * H), jnp.float32),   # last hidden states
        ),
        grid=(B // Bt,),
        in_specs=[
            pl.BlockSpec((L, Bt, D), lambda b: (0, b, 0)),
            pl.BlockSpec((Bt, 1), lambda b: (b, 0)),
            _vmem(), _vmem(), _vmem(), _vmem(),
        ],
        out_specs=(
            pl.BlockSpec((L, Bt, H), lambda b: (0, b, 0)),
            pl.BlockSpec((L, Bt, H), lambda b: (0, b, 0)),
            pl.BlockSpec((Bt, 2 * H), lambda b: (b, 0)),
        ),
        scratch_shapes=[
            pltpu.VMEM((L, Bt, 6 * H), jnp.bfloat16),   # hoisted input projections
            pltpu.VMEM((Bt, 2 * H), jnp.float32),       # [h_f | h_b] carry
        ],
        compiler_params=pltpu.CompilerParams(
            dimension_semantics=("parallel",),
            vmem_limit_bytes=_vmem_limit_bytes()),
    )(emb_tm, lens, _bf16(w_ih_cat), b_ih_cat, _bf16(w_hh_blk), b_hh_cat)
    return out_f, out_b, h_last


# ---------------------------------------------------------------------------
# Kernel 2: fused feature kernel (per batch tile):
#   pool branch  : Conv1d(1, Cp, 3D, stride=D) + ReLU + max-over-time
#   rnn_h copy   : last hidden states
#   cnn branches : Conv2d(1, Cc, (ws, 2H), pad=(ws-1,0)) + ReLU + max-over-time
# Convolutions are per-tap big-M projections combined by time-shifted adds
# (no padded-input copies, no zero-row matmuls); the (Bt, Fin) feature slab is
# written with direct sliced stores.
# ---------------------------------------------------------------------------
def make_feature_kernel(L, D, H, Cp, Cc, ksizes):
    n_ws = len(ksizes)

    def kernel(emb_ref, outf_ref, outb_ref, rnnh_ref, pool_w_ref, pool_b_ref,
               *rest):
        cnn_wf = rest[0:n_ws]
        cnn_wb = rest[n_ws:2 * n_ws]
        cnn_b = rest[2 * n_ws:3 * n_ws]
        o_ref = rest[3 * n_ws]
        acc_s = rest[3 * n_ws + 1]
        Bt = emb_ref.shape[1]

        # --- pool branch: 3 full-length per-tap projections + shifted adds
        Tp = L - 2
        emb_flat = emb_ref[...].reshape(L * Bt, D)                  # bf16
        taps = [jnp.dot(emb_flat, pool_w_ref[k * D:(k + 1) * D, :],
                        preferred_element_type=jnp.float32).reshape(L, Bt, Cp)
                for k in range(3)]
        y = taps[0][0:Tp] + taps[1][1:Tp + 1] + taps[2][2:Tp + 2] + pool_b_ref[...]
        o_ref[:, 0:Cp] = jnp.max(jnp.maximum(y, 0.0), axis=0)       # (Bt, Cp)

        # --- GRU last hidden state straight into the feature slab
        o_ref[:, Cp:Cp + 2 * H] = rnnh_ref[...]                     # (Bt, 2H)

        # --- cnn branches: per-tap projections accumulated with time shifts
        f_flat = outf_ref[...].reshape(L * Bt, H)                   # bf16
        b_flat = outb_ref[...].reshape(L * Bt, H)
        off = Cp + 2 * H
        for wi, ws in enumerate(ksizes):
            T = L + ws - 1
            acc_s[...] = jnp.zeros_like(acc_s)
            for k in range(ws):
                pk = (jnp.dot(f_flat, cnn_wf[wi][k * H:(k + 1) * H, :],
                              preferred_element_type=jnp.float32)
                      + jnp.dot(b_flat, cnn_wb[wi][k * H:(k + 1) * H, :],
                                preferred_element_type=jnp.float32)
                      ).reshape(L, Bt, Cc)
                s = ws - 1 - k
                acc_s[s:s + L] = acc_s[s:s + L] + pk
            yc = jnp.maximum(acc_s[0:T] + cnn_b[wi][...], 0.0)       # (T, Bt, Cc)
            o_ref[:, off:off + Cc] = jnp.max(yc, axis=0)             # (Bt, Cc)
            off += Cc

    return kernel


def fused_features(emb_tm, out_f, out_b, rnn_h, p, cfg, batch_tile=None):
    L, B, D = emb_tm.shape
    H = cfg["text_rnn_size"]
    R = 2 * H
    Cp = cfg["pool_channels"]
    Cc = cfg["cnn_out_channels"]
    ksizes = tuple(cfg["cnn_kernel_sizes"])
    n_ws = len(ksizes)
    Fin = Cp + R + n_ws * Cc

    Bt = B if batch_tile is None else batch_tile
    assert B % Bt == 0
    if Bt != B:
        assert Bt % 16 == 0, "batch tile must be a multiple of 16 (bf16 sublane)"

    # split each CNN weight into its fwd / bwd tap halves (matches the [f|b]
    # feature layout of the biGRU outputs, so no lane concat in the kernel).
    cnn_wf, cnn_wb = [], []
    for ws, w in zip(ksizes, p["cnn_w_t"]):
        w4 = w.reshape(ws, 2, H, Cc)
        cnn_wf.append(_bf16(w4[:, 0].reshape(ws * H, Cc)))
        cnn_wb.append(_bf16(w4[:, 1].reshape(ws * H, Cc)))

    kernel = make_feature_kernel(L, D, H, Cp, Cc, ksizes)
    in_specs = ([
        pl.BlockSpec((L, Bt, D), lambda b: (0, b, 0)),
        pl.BlockSpec((L, Bt, H), lambda b: (0, b, 0)),
        pl.BlockSpec((L, Bt, H), lambda b: (0, b, 0)),
        pl.BlockSpec((Bt, R), lambda b: (b, 0)),
    ] + [_vmem()] * (2 + 3 * n_ws))       # weights: whole-array VMEM

    args = ([emb_tm, out_f, out_b, rnn_h, _bf16(p["pool_w_t"]), p["pool_b"]]
            + cnn_wf + cnn_wb + list(p["cnn_b"]))

    return pl.pallas_call(
        kernel,
        out_shape=jax.ShapeDtypeStruct((B, Fin), jnp.float32),
        grid=(B // Bt,),
        in_specs=in_specs,
        out_specs=pl.BlockSpec((Bt, Fin), lambda b: (b, 0)),
        scratch_shapes=[pltpu.VMEM((L + max(ksizes) - 1, Bt, Cc), jnp.float32)],
        compiler_params=pltpu.CompilerParams(
            dimension_semantics=("parallel",),
            vmem_limit_bytes=_vmem_limit_bytes()),
    )(*args)


# ---------------------------------------------------------------------------
# Kernel 3: MLP (fc1-relu, fc2-relu, fc3) + BatchNorm1d (training-mode batch
# statistics over the whole batch) + l2norm along the feature axis.
# ---------------------------------------------------------------------------
def mlp_bn_l2_kernel(x_ref, w1_ref, b1_ref, w2_ref, b2_ref, w3_ref, b3_ref,
                     gamma_ref, beta_ref, o_ref):
    h = jnp.dot(x_ref[...].astype(jnp.bfloat16), w1_ref[...],
                preferred_element_type=jnp.float32) + b1_ref[...]
    h = jnp.maximum(h, 0.0)
    h = jnp.dot(h.astype(jnp.bfloat16), w2_ref[...],
                preferred_element_type=jnp.float32) + b2_ref[...]
    h = jnp.maximum(h, 0.0)
    h = jnp.dot(h.astype(jnp.bfloat16), w3_ref[...],
                preferred_element_type=jnp.float32) + b3_ref[...]
    # BatchNorm1d (training mode: biased batch variance), eps = 1e-5
    mean = jnp.mean(h, axis=0, keepdims=True)
    var = jnp.mean((h - mean) ** 2, axis=0, keepdims=True)
    h = (h - mean) * lax.rsqrt(var + 1e-5) * gamma_ref[...] + beta_ref[...]
    # l2norm via EUP rsqrt
    o_ref[...] = h * lax.rsqrt(jnp.sum(h * h, axis=1, keepdims=True))


def mlp_bn_l2(features, p, out_size):
    B = features.shape[0]
    return pl.pallas_call(
        mlp_bn_l2_kernel,
        out_shape=jax.ShapeDtypeStruct((B, out_size), jnp.float32),
        in_specs=[_vmem() for _ in range(9)],
        out_specs=_vmem(),
        compiler_params=pltpu.CompilerParams(vmem_limit_bytes=_vmem_limit_bytes()),
    )(features, _bf16(p["fc1_w_t"]), p["fc1_b"], _bf16(p["fc2_w_t"]), p["fc2_b"],
      _bf16(p["fc3_w_t"]), p["fc3_b"], p["bn_gamma"], p["bn_beta"])


# ---------------------------------------------------------------------------
# Full forward pass (glue: embedding gather only).
# ---------------------------------------------------------------------------
def syntax_multilevel_encoding(texts, lengths, p, cfg, batch_tile=None):
    # gather the embeddings directly in time-major (L, B, D); bf16 for the MXU
    emb_tm = jnp.take(p["embed"], texts.T, axis=0).astype(jnp.bfloat16)
    out_f, out_b, rnn_h = bigru(emb_tm, lengths, p, batch_tile=batch_tile)
    features = fused_features(emb_tm, out_f, out_b, rnn_h, p, cfg,
                              batch_tile=batch_tile)                # (B, Fin)
    return mlp_bn_l2(features, p, cfg["out_size"])


# ---------------------------------------------------------------------------
# Pure-JAX reference (same math, mirrored bf16 matmul inputs, no Pallas).
# ---------------------------------------------------------------------------
def _ref_dot(a, b):
    return jnp.dot(a.astype(jnp.bfloat16), b.astype(jnp.bfloat16),
                   preferred_element_type=jnp.float32)


def reference_forward(texts, lengths, p, cfg):
    B, L = texts.shape
    D = cfg["word_dim"]
    H = cfg["text_rnn_size"]
    emb = jnp.take(p["embed"], texts, axis=0)                      # (B, L, D) f32
    feats = []

    # pool branch
    Tp = L - 2
    pool_windows = jnp.stack(
        [emb[:, t:t + 3, :].reshape(B, 3 * D) for t in range(Tp)], axis=1)
    y = _ref_dot(pool_windows.reshape(B * Tp, 3 * D),
                 p["pool_w_t"]).reshape(B, Tp, -1) + p["pool_b"]
    feats.append(jnp.max(jnp.maximum(y, 0.0), axis=1))

    # biGRU
    lens = lengths.reshape(B, 1)

    def cell(x_t, h, wi, wh, bi, bh):
        gi = _ref_dot(x_t, wi) + bi
        gh = _ref_dot(h, wh) + bh
        r = jax.nn.sigmoid(gi[:, :H] + gh[:, :H])
        z = jax.nn.sigmoid(gi[:, H:2 * H] + gh[:, H:2 * H])
        n = jnp.tanh(gi[:, 2 * H:] + r * gh[:, 2 * H:])
        return (1.0 - z) * n + z * h

    h = jnp.zeros((B, H), jnp.float32)
    outs_f = []
    for t in range(L):
        h_new = cell(emb[:, t], h, p["w_ih_f_t"], p["w_hh_f_t"], p["b_ih_f"], p["b_hh_f"])
        mask = t < lens
        h = jnp.where(mask, h_new, h)
        outs_f.append(jnp.where(mask, h_new, 0.0))
    h_f = h
    h = jnp.zeros((B, H), jnp.float32)
    outs_b = [None] * L
    for t in range(L - 1, -1, -1):
        h_new = cell(emb[:, t], h, p["w_ih_b_t"], p["w_hh_b_t"], p["b_ih_b"], p["b_hh_b"])
        mask = t < lens
        h = jnp.where(mask, h_new, h)
        outs_b[t] = jnp.where(mask, h_new, 0.0)
    h_b = h
    rnn_out = jnp.concatenate([jnp.stack(outs_f, 1), jnp.stack(outs_b, 1)], axis=-1)
    feats.append(jnp.concatenate([h_f, h_b], axis=1))

    # cnn branches
    R = 2 * H
    cnn_feats = []
    for ws, w_t, b in zip(cfg["cnn_kernel_sizes"], p["cnn_w_t"], p["cnn_b"]):
        padded = jnp.pad(rnn_out, ((0, 0), (ws - 1, ws - 1), (0, 0)))
        T = L + ws - 1
        windows = jnp.stack(
            [padded[:, t:t + ws, :].reshape(B, ws * R) for t in range(T)], axis=1)
        yc = _ref_dot(windows.reshape(B * T, ws * R), w_t).reshape(B, T, -1) + b
        cnn_feats.append(jnp.max(jnp.maximum(yc, 0.0), axis=1))
    feats.append(jnp.concatenate(cnn_feats, axis=1))

    features = jnp.concatenate(feats, axis=1)
    h1 = jnp.maximum(_ref_dot(features, p["fc1_w_t"]) + p["fc1_b"], 0.0)
    h2 = jnp.maximum(_ref_dot(h1, p["fc2_w_t"]) + p["fc2_b"], 0.0)
    h3 = _ref_dot(h2, p["fc3_w_t"]) + p["fc3_b"]
    mean = jnp.mean(h3, axis=0, keepdims=True)
    var = jnp.mean((h3 - mean) ** 2, axis=0, keepdims=True)
    h3 = (h3 - mean) / jnp.sqrt(var + 1e-5) * p["bn_gamma"] + p["bn_beta"]
    return h3 / jnp.sqrt(jnp.sum(h3 * h3, axis=1, keepdims=True))


# ---------------------------------------------------------------------------
# Deterministic parameter initialization (shapes follow the module __init__).
# ---------------------------------------------------------------------------
def init_params(key, cfg):
    D, V, H = cfg["word_dim"], cfg["vocab_size"], cfg["text_rnn_size"]
    Cp, Cc = cfg["pool_channels"], cfg["cnn_out_channels"]
    R = 2 * H
    keys = jax.random.split(key, 20)
    p = {}
    p["embed"] = jax.random.uniform(keys[0], (V, D), jnp.float32, -0.1, 0.1)
    # Conv1d(1, Cp, 3D, stride=D): weight (Cp, 1, 3D) -> stored transposed (3D, Cp)
    p["pool_w_t"] = 0.05 * jax.random.normal(keys[1], (3 * D, Cp), jnp.float32)
    p["pool_b"] = jnp.zeros((1, Cp), jnp.float32)
    # GRU weights, PyTorch default uniform(-1/sqrt(H), 1/sqrt(H)); rows [r; z; n]
    s = 1.0 / (H ** 0.5)
    p["w_ih_f_t"] = jax.random.uniform(keys[2], (D, 3 * H), jnp.float32, -s, s)
    p["w_hh_f_t"] = jax.random.uniform(keys[3], (H, 3 * H), jnp.float32, -s, s)
    p["b_ih_f"] = jax.random.uniform(keys[4], (1, 3 * H), jnp.float32, -s, s)
    p["b_hh_f"] = jax.random.uniform(keys[5], (1, 3 * H), jnp.float32, -s, s)
    p["w_ih_b_t"] = jax.random.uniform(keys[6], (D, 3 * H), jnp.float32, -s, s)
    p["w_hh_b_t"] = jax.random.uniform(keys[7], (H, 3 * H), jnp.float32, -s, s)
    p["b_ih_b"] = jax.random.uniform(keys[8], (1, 3 * H), jnp.float32, -s, s)
    p["b_hh_b"] = jax.random.uniform(keys[9], (1, 3 * H), jnp.float32, -s, s)
    # Conv2d(1, Cc, (ws, 2H)): weight (Cc, 1, ws, 2H) -> stored transposed (ws*2H, Cc)
    p["cnn_w_t"], p["cnn_b"] = [], []
    for i, ws in enumerate(cfg["cnn_kernel_sizes"]):
        p["cnn_w_t"].append(0.05 * jax.random.normal(keys[10 + i], (ws * R, Cc), jnp.float32))
        p["cnn_b"].append(jnp.zeros((1, Cc), jnp.float32))
    # MLP: xavier_normal weights (stored transposed), zero biases; BN gamma=1, beta=0
    Fin = Cp + R + Cc * len(cfg["cnn_kernel_sizes"])
    H1, H2 = cfg["mapping_hidden_sizes"]
    O = cfg["out_size"]

    def xavier(k, fin, fout):
        std = (2.0 / (fin + fout)) ** 0.5
        return std * jax.random.normal(k, (fin, fout), jnp.float32)

    p["fc1_w_t"] = xavier(keys[14], Fin, H1)
    p["fc1_b"] = jnp.zeros((1, H1), jnp.float32)
    p["fc2_w_t"] = xavier(keys[15], H1, H2)
    p["fc2_b"] = jnp.zeros((1, H2), jnp.float32)
    p["fc3_w_t"] = xavier(keys[16], H2, O)
    p["fc3_b"] = jnp.zeros((1, O), jnp.float32)
    p["bn_gamma"] = jnp.ones((1, O), jnp.float32)
    p["bn_beta"] = jnp.zeros((1, O), jnp.float32)
    return p


if __name__ == "__main__":
    cfg = dict(
        vocab_size=100, word_dim=32, pool_channels=32, text_rnn_size=32,
        cnn_out_channels=32, cnn_kernel_sizes=(2, 3),
        mapping_hidden_sizes=(64, 64), out_size=32,
        text_norm=True, have_last_bn=True,
    )
    key = jax.random.PRNGKey(0)
    pkey, tkey = jax.random.split(key)
    params = init_params(pkey, cfg)

    B, L = 32, 8
    texts = jax.random.randint(tkey, (B, L), 0, cfg["vocab_size"], dtype=jnp.int32)
    # lengths in [1, L], max length == L (pad_packed semantics)
    lengths = ((jnp.arange(B) % L) + 1).astype(jnp.int32)

    out = syntax_multilevel_encoding(texts, lengths, params, cfg, batch_tile=16)
    out = jax.block_until_ready(out)

    ref = reference_forward(texts, lengths, params, cfg)
    assert out.shape == (B, cfg["out_size"])
    assert bool(jnp.all(jnp.isfinite(out)))
    if not jnp.allclose(out, ref, rtol=3e-2, atol=3e-2):
        max_err = float(jnp.max(jnp.abs(out - ref)))
        raise AssertionError(f"Pallas output does not match JAX reference (max abs err {max_err})")
    print("KERNEL_OK")
</pallas_src>

<mosaic_0001>
module attributes {stable_mosaic.version = 11 : i64} {
  func.func @bigru_kernel(%arg0: i32, %arg1: memref<8x16x32xbf16, #tpu.memory_space<vmem>>, %arg2: memref<16x1xi32, #tpu.memory_space<vmem>>, %arg3: memref<32x192xbf16, #tpu.memory_space<vmem>>, %arg4: memref<1x192xf32, #tpu.memory_space<vmem>>, %arg5: memref<64x192xbf16, #tpu.memory_space<vmem>>, %arg6: memref<1x192xf32, #tpu.memory_space<vmem>>, %arg7: memref<8x16x32xbf16, #tpu.memory_space<vmem>>, %arg8: memref<8x16x32xbf16, #tpu.memory_space<vmem>>, %arg9: memref<16x64xf32, #tpu.memory_space<vmem>>, %arg10: memref<8x16x192xbf16, #tpu.memory_space<vmem>>, %arg11: memref<16x64xf32, #tpu.memory_space<vmem>>) attributes {dimension_semantics = [#tpu.dimension_semantics<parallel>], iteration_bounds = array<i64: 2>, scalar_prefetch = 0 : i64, scratch_operands = 2 : i64, tpu.core_type = #tpu.core_type<tc>, window_params = [{transform_indices = @transform_0, window_bounds = array<i64: 8, 16, 32>}, {transform_indices = @transform_1, window_bounds = array<i64: 16, 1>}, {pipeline_mode = #tpu.pipeline_mode<synchronous>, transform_indices = @transform_2, window_bounds = array<i64: 32, 192>}, {pipeline_mode = #tpu.pipeline_mode<synchronous>, transform_indices = @transform_3, window_bounds = array<i64: 1, 192>}, {pipeline_mode = #tpu.pipeline_mode<synchronous>, transform_indices = @transform_4, window_bounds = array<i64: 64, 192>}, {pipeline_mode = #tpu.pipeline_mode<synchronous>, transform_indices = @transform_5, window_bounds = array<i64: 1, 192>}, {transform_indices = @transform_6, window_bounds = array<i64: 8, 16, 32>}, {transform_indices = @transform_7, window_bounds = array<i64: 8, 16, 32>}, {transform_indices = @transform_8, window_bounds = array<i64: 16, 64>}]} {
    %c0 = arith.constant 0 : index
    %c0_0 = arith.constant 0 : index
    %c0_1 = arith.constant 0 : index
    %0 = vector.load %arg1[%c0, %c0_0, %c0_1] : memref<8x16x32xbf16, #tpu.memory_space<vmem>>, vector<8x16x32xbf16>
    %1 = vector.shape_cast %0 : vector<8x16x32xbf16> to vector<128x32xbf16>
    %c0_2 = arith.constant 0 : index
    %c0_3 = arith.constant 0 : index
    %2 = vector.load %arg3[%c0_2, %c0_3] : memref<32x192xbf16, #tpu.memory_space<vmem>>, vector<32x192xbf16>
    %cst = arith.constant dense<0.000000e+00> : vector<128x192xf32>
    %3 = tpu.matmul %1, %2, %cst {dimension_numbers = #tpu.dot_dimension_numbers<[1], [0], [0], [1], [0, 0, 1, 1], [], []>} : vector<128x32xbf16>, vector<32x192xbf16>, vector<128x192xf32> -> vector<128x192xf32>
    %c0_4 = arith.constant 0 : index
    %c0_5 = arith.constant 0 : index
    %4 = vector.load %arg4[%c0_4, %c0_5] : memref<1x192xf32, #tpu.memory_space<vmem>>, vector<1x192xf32>
    %5 = vector.broadcast %4 : vector<1x192xf32> to vector<128x192xf32>
    %6 = arith.addf %3, %5 : vector<128x192xf32>
    %7 = arith.truncf %6 : vector<128x192xf32> to vector<128x192xbf16>
    %8 = vector.shape_cast %7 : vector<128x192xbf16> to vector<8x16x192xbf16>
    %c0_6 = arith.constant 0 : index
    %c0_7 = arith.constant 0 : index
    %c0_8 = arith.constant 0 : index
    %9 = vector.load %arg10[%c0_6, %c0_7, %c0_8] : memref<8x16x192xbf16, #tpu.memory_space<vmem>>, vector<8x16x192xbf16>
    tpu.vector_store %arg10[%c0_6, %c0_7, %c0_8], %8 {strides = array<i32>} : memref<8x16x192xbf16, #tpu.memory_space<vmem>>, vector<8x16x192xbf16>,
    %c0_9 = arith.constant 0 : index
    %c0_10 = arith.constant 0 : index
    %10 = vector.load %arg5[%c0_9, %c0_10] : memref<64x192xbf16, #tpu.memory_space<vmem>>, vector<64x192xbf16>
    %c0_11 = arith.constant 0 : index
    %c0_12 = arith.constant 0 : index
    %11 = vector.load %arg6[%c0_11, %c0_12] : memref<1x192xf32, #tpu.memory_space<vmem>>, vector<1x192xf32>
    %c0_13 = arith.constant 0 : index
    %c0_14 = arith.constant 0 : index
    %12 = vector.load %arg2[%c0_13, %c0_14] : memref<16x1xi32, #tpu.memory_space<vmem>>, vector<16x1xi32>
    %cst_15 = arith.constant 0.000000e+00 : f32
    %13 = vector.broadcast %cst_15 : f32 to vector<16x64xf32>
    %c0_16 = arith.constant 0 : index
    %c0_17 = arith.constant 0 : index
    %14 = vector.load %arg11[%c0_16, %c0_17] : memref<16x64xf32, #tpu.memory_space<vmem>>, vector<16x64xf32>
    tpu.vector_store %arg11[%c0_16, %c0_17], %13 {strides = array<i32>} : memref<16x64xf32, #tpu.memory_space<vmem>>, vector<16x64xf32>,
    %c0_i32 = arith.constant 0 : i32
    %c8_i32 = arith.constant 8 : i32
    %15 = arith.addi %c0_i32, %c8_i32 : i32
    %c1_i32 = arith.constant 1 : i32
    scf.for %arg12 = %c0_i32 to %15 step %c1_i32  : i32 {
      %c7_i32 = arith.constant 7 : i32
      %18 = arith.subi %c7_i32, %arg12 : i32
      %c0_23 = arith.constant 0 : index
      %c0_24 = arith.constant 0 : index
      %19 = vector.load %arg11[%c0_23, %c0_24] : memref<16x64xf32, #tpu.memory_space<vmem>>, vector<16x64xf32>
      %20 = arith.truncf %19 : vector<16x64xf32> to vector<16x64xbf16>
      %cst_25 = arith.constant dense<0.000000e+00> : vector<16x192xf32>
      %21 = tpu.matmul %20, %10, %cst_25 {dimension_numbers = #tpu.dot_dimension_numbers<[1], [0], [0], [1], [0, 0, 1, 1], [], []>} : vector<16x64xbf16>, vector<64x192xbf16>, vector<16x192xf32> -> vector<16x192xf32>
      %22 = vector.broadcast %11 : vector<1x192xf32> to vector<16x192xf32>
      %23 = arith.addf %21, %22 : vector<16x192xf32>
      %24 = arith.index_cast %arg12 : i32 to index
      %c0_26 = arith.constant 0 : index
      %c0_27 = arith.constant 0 : index
      %25 = vector.load %arg10[%24, %c0_26, %c0_27] : memref<8x16x192xbf16, #tpu.memory_space<vmem>>, vector<1x16x192xbf16>
      %26 = vector.shape_cast %25 : vector<1x16x192xbf16> to vector<16x192xbf16>
      %27 = arith.index_cast %18 : i32 to index
      %c0_28 = arith.constant 0 : index
      %c0_29 = arith.constant 0 : index
      %28 = vector.load %arg10[%27, %c0_28, %c0_29] : memref<8x16x192xbf16, #tpu.memory_space<vmem>>, vector<1x16x192xbf16>
      %29 = vector.shape_cast %28 : vector<1x16x192xbf16> to vector<16x192xbf16>
      %30 = vector.extract_strided_slice %19 {offsets = [0, 0], sizes = [16, 32], strides = [1, 1]} : vector<16x64xf32> to vector<16x32xf32>
      %31 = vector.extract_strided_slice %26 {offsets = [0, 0], sizes = [16, 64], strides = [1, 1]} : vector<16x192xbf16> to vector<16x64xbf16>
      %32 = vector.extract_strided_slice %23 {offsets = [0, 0], sizes = [16, 64], strides = [1, 1]} : vector<16x192xf32> to vector<16x64xf32>
      %33 = arith.extf %31 : vector<16x64xbf16> to vector<16x64xf32>
      %34 = arith.addf %33, %32 : vector<16x64xf32>
      %35 = arith.negf %34 : vector<16x64xf32>
      %36 = math.exp %35 : vector<16x64xf32>
      %cst_30 = arith.constant 1.000000e+00 : f32
      %37 = vector.broadcast %cst_30 : f32 to vector<16x64xf32>
      %38 = arith.addf %37, %36 : vector<16x64xf32>
      %39 = arith.divf %37, %38 : vector<16x64xf32>
      %40 = vector.extract_strided_slice %26 {offsets = [0, 64], sizes = [16, 32], strides = [1, 1]} : vector<16x192xbf16> to vector<16x32xbf16>
      %41 = vector.extract_strided_slice %39 {offsets = [0, 0], sizes = [16, 32], strides = [1, 1]} : vector<16x64xf32> to vector<16x32xf32>
      %42 = vector.extract_strided_slice %23 {offsets = [0, 64], sizes = [16, 32], strides = [1, 1]} : vector<16x192xf32> to vector<16x32xf32>
      %43 = arith.mulf %41, %42 : vector<16x32xf32>
      %44 = arith.extf %40 : vector<16x32xbf16> to vector<16x32xf32>
      %45 = arith.addf %44, %43 : vector<16x32xf32>
      %46 = math.tanh %45 : vector<16x32xf32>
      %47 = vector.extract_strided_slice %39 {offsets = [0, 32], sizes = [16, 32], strides = [1, 1]} : vector<16x64xf32> to vector<16x32xf32>
      %cst_31 = arith.constant 1.000000e+00 : f32
      %48 = vector.broadcast %cst_31 : f32 to vector<16x32xf32>
      %49 = arith.subf %48, %47 : vector<16x32xf32>
      %50 = arith.mulf %49, %46 : vector<16x32xf32>
      %51 = arith.mulf %47, %30 : vector<16x32xf32>
      %52 = arith.addf %50, %51 : vector<16x32xf32>
      %53 = vector.broadcast %arg12 : i32 to vector<16x1xi32>
      %54 = arith.cmpi slt, %53, %12 : vector<16x1xi32>
      %55 = vector.shape_cast %54 : vector<16x1xi1> to vector<16x1xi1>
      %56 = vector.broadcast %55 : vector<16x1xi1> to vector<16x32xi1>
      %57 = arith.select %56, %52, %30 : vector<16x32xi1>, vector<16x32xf32>
      %c0_32 = arith.constant 0 : index
      %c0_33 = arith.constant 0 : index
      %58 = vector.load %arg11[%c0_32, %c0_33] : memref<16x64xf32, #tpu.memory_space<vmem>>, vector<16x32xf32>
      tpu.vector_store %arg11[%c0_32, %c0_33], %57 {strides = array<i32>} : memref<16x64xf32, #tpu.memory_space<vmem>>, vector<16x32xf32>,
      %cst_34 = arith.constant 0.000000e+00 : f32
      %59 = vector.shape_cast %54 : vector<16x1xi1> to vector<16x1xi1>
      %60 = vector.broadcast %59 : vector<16x1xi1> to vector<16x32xi1>
      %61 = vector.broadcast %cst_34 : f32 to vector<16x32xf32>
      %62 = arith.select %60, %52, %61 : vector<16x32xi1>, vector<16x32xf32>
      %63 = arith.truncf %62 : vector<16x32xf32> to vector<16x32xbf16>
      %64 = arith.index_cast %arg12 : i32 to index
      %c0_35 = arith.constant 0 : index
      %c0_36 = arith.constant 0 : index
      %65 = vector.load %arg7[%64, %c0_35, %c0_36] : memref<8x16x32xbf16, #tpu.memory_space<vmem>>, vector<1x16x32xbf16>
      %66 = vector.shape_cast %65 : vector<1x16x32xbf16> to vector<16x32xbf16>
      %67 = vector.shape_cast %63 : vector<16x32xbf16> to vector<1x16x32xbf16>
      tpu.vector_store %arg7[%64, %c0_35, %c0_36], %67 {strides = array<i32>} : memref<8x16x32xbf16, #tpu.memory_space<vmem>>, vector<1x16x32xbf16>,
      %68 = vector.extract_strided_slice %19 {offsets = [0, 32], sizes = [16, 32], strides = [1, 1]} : vector<16x64xf32> to vector<16x32xf32>
      %69 = vector.extract_strided_slice %29 {offsets = [0, 96], sizes = [16, 64], strides = [1, 1]} : vector<16x192xbf16> to vector<16x64xbf16>
      %70 = vector.extract_strided_slice %23 {offsets = [0, 96], sizes = [16, 64], strides = [1, 1]} : vector<16x192xf32> to vector<16x64xf32>
      %71 = arith.extf %69 : vector<16x64xbf16> to vector<16x64xf32>
      %72 = arith.addf %71, %70 : vector<16x64xf32>
      %73 = arith.negf %72 : vector<16x64xf32>
      %74 = math.exp %73 : vector<16x64xf32>
      %cst_37 = arith.constant 1.000000e+00 : f32
      %75 = vector.broadcast %cst_37 : f32 to vector<16x64xf32>
      %76 = arith.addf %75, %74 : vector<16x64xf32>
      %77 = arith.divf %75, %76 : vector<16x64xf32>
      %78 = vector.extract_strided_slice %29 {offsets = [0, 160], sizes = [16, 32], strides = [1, 1]} : vector<16x192xbf16> to vector<16x32xbf16>
      %79 = vector.extract_strided_slice %77 {offsets = [0, 0], sizes = [16, 32], strides = [1, 1]} : vector<16x64xf32> to vector<16x32xf32>
      %80 = vector.extract_strided_slice %23 {offsets = [0, 160], sizes = [16, 32], strides = [1, 1]} : vector<16x192xf32> to vector<16x32xf32>
      %81 = arith.mulf %79, %80 : vector<16x32xf32>
      %82 = arith.extf %78 : vector<16x32xbf16> to vector<16x32xf32>
      %83 = arith.addf %82, %81 : vector<16x32xf32>
      %84 = math.tanh %83 : vector<16x32xf32>
      %85 = vector.extract_strided_slice %77 {offsets = [0, 32], sizes = [16, 32], strides = [1, 1]} : vector<16x64xf32> to vector<16x32xf32>
      %cst_38 = arith.constant 1.000000e+00 : f32
      %86 = vector.broadcast %cst_38 : f32 to vector<16x32xf32>
      %87 = arith.subf %86, %85 : vector<16x32xf32>
      %88 = arith.mulf %87, %84 : vector<16x32xf32>
      %89 = arith.mulf %85, %68 : vector<16x32xf32>
      %90 = arith.addf %88, %89 : vector<16x32xf32>
      %91 = vector.broadcast %18 : i32 to vector<16x1xi32>
      %92 = arith.cmpi slt, %91, %12 : vector<16x1xi32>
      %93 = vector.shape_cast %92 : vector<16x1xi1> to vector<16x1xi1>
      %94 = vector.broadcast %93 : vector<16x1xi1> to vector<16x32xi1>
      %95 = arith.select %94, %90, %68 : vector<16x32xi1>, vector<16x32xf32>
      %c0_39 = arith.constant 0 : index
      %c32 = arith.constant 32 : index
      %96 = vector.load %arg11[%c0_39, %c32] : memref<16x64xf32, #tpu.memory_space<vmem>>, vector<16x32xf32>
      tpu.vector_store %arg11[%c0_39, %c32], %95 {strides = array<i32>} : memref<16x64xf32, #tpu.memory_space<vmem>>, vector<16x32xf32>,
      %cst_40 = arith.constant 0.000000e+00 : f32
      %97 = vector.shape_cast %92 : vector<16x1xi1> to vector<16x1xi1>
      %98 = vector.broadcast %97 : vector<16x1xi1> to vector<16x32xi1>
      %99 = vector.broadcast %cst_40 : f32 to vector<16x32xf32>
      %100 = arith.select %98, %90, %99 : vector<16x32xi1>, vector<16x32xf32>
      %101 = arith.truncf %100 : vector<16x32xf32> to vector<16x32xbf16>
      %102 = arith.index_cast %18 : i32 to index
      %c0_41 = arith.constant 0 : index
      %c0_42 = arith.constant 0 : index
      %103 = vector.load %arg8[%102, %c0_41, %c0_42] : memref<8x16x32xbf16, #tpu.memory_space<vmem>>, vector<1x16x32xbf16>
      %104 = vector.shape_cast %103 : vector<1x16x32xbf16> to vector<16x32xbf16>
      %105 = vector.shape_cast %101 : vector<16x32xbf16> to vector<1x16x32xbf16>
      tpu.vector_store %arg8[%102, %c0_41, %c0_42], %105 {strides = array<i32>} : memref<8x16x32xbf16, #tpu.memory_space<vmem>>, vector<1x16x32xbf16>,
    }
    %c8_i32_18 = arith.constant 8 : i32
    %c0_19 = arith.constant 0 : index
    %c0_20 = arith.constant 0 : index
    %16 = vector.load %arg11[%c0_19, %c0_20] : memref<16x64xf32, #tpu.memory_space<vmem>>, vector<16x64xf32>
    %c0_21 = arith.constant 0 : index
    %c0_22 = arith.constant 0 : index
    %17 = vector.load %arg9[%c0_21, %c0_22] : memref<16x64xf32, #tpu.memory_space<vmem>>, vector<16x64xf32>
    tpu.vector_store %arg9[%c0_21, %c0_22], %16 {strides = array<i32>} : memref<16x64xf32, #tpu.memory_space<vmem>>, vector<16x64xf32>,
    return
  }
  func.func @transform_0(%arg0: i32) -> (i32, i32, i32) {
    %c0_i32 = arith.constant 0 : i32
    %c0_i32_0 = arith.constant 0 : i32
    %c0_i32_1 = arith.constant 0 : i32
    return %c0_i32, %arg0, %c0_i32_0 : i32, i32, i32
  }
  func.func @transform_1(%arg0: i32) -> (i32, i32) {
    %c0_i32 = arith.constant 0 : i32
    %c0_i32_0 = arith.constant 0 : i32
    return %arg0, %c0_i32 : i32, i32
  }
  func.func @transform_2(%arg0: i32) -> (i32, i32) {
    %c0_i32 = arith.constant 0 : i32
    %c0_i32_0 = arith.constant 0 : i32
    %c0_i32_1 = arith.constant 0 : i32
    return %c0_i32, %c0_i32_0 : i32, i32
  }
  func.func @transform_3(%arg0: i32) -> (i32, i32) {
    %c0_i32 = arith.constant 0 : i32
    %c0_i32_0 = arith.constant 0 : i32
    %c0_i32_1 = arith.constant 0 : i32
    return %c0_i32, %c0_i32_0 : i32, i32
  }
  func.func @transform_4(%arg0: i32) -> (i32, i32) {
    %c0_i32 = arith.constant 0 : i32
    %c0_i32_0 = arith.constant 0 : i32
    %c0_i32_1 = arith.constant 0 : i32
    return %c0_i32, %c0_i32_0 : i32, i32
  }
  func.func @transform_5(%arg0: i32) -> (i32, i32) {
    %c0_i32 = arith.constant 0 : i32
    %c0_i32_0 = arith.constant 0 : i32
    %c0_i32_1 = arith.constant 0 : i32
    return %c0_i32, %c0_i32_0 : i32, i32
  }
  func.func @transform_6(%arg0: i32) -> (i32, i32, i32) {
    %c0_i32 = arith.constant 0 : i32
    %c0_i32_0 = arith.constant 0 : i32
    %c0_i32_1 = arith.constant 0 : i32
    return %c0_i32, %arg0, %c0_i32_0 : i32, i32, i32
  }
  func.func @transform_7(%arg0: i32) -> (i32, i32, i32) {
    %c0_i32 = arith.constant 0 : i32
    %c0_i32_0 = arith.constant 0 : i32
    %c0_i32_1 = arith.constant 0 : i32
    return %c0_i32, %arg0, %c0_i32_0 : i32, i32, i32
  }
  func.func @transform_8(%arg0: i32) -> (i32, i32) {
    %c0_i32 = arith.constant 0 : i32
    %c0_i32_0 = arith.constant 0 : i32
    return %arg0, %c0_i32 : i32, i32
  }
}

</mosaic_0001>

<llo_original>
// kernel: tpu_custom_call.1
$region0: #{tpu_custom_call.1}
  #allocation0 [shape = 'u32[]', space=smem, size = 0x4, offset = 0x4, fixed_abs, tag = 'smem constant byte address 0x4 - core index']
  #allocation1 [shape = 'u32[144,128]{1,0:T(1,128)}', space=vmem, size = 0x12000, scoped, tag = 'internal scratch']
  #allocation2 [shape = 'bf16[8,16,192]{2,1,0:T(8,128)(2,1)}', space=vmem, size = 0x10000, scoped, tag = 'scratch operand']
  #allocation3 [shape = 'f32[16,64]{1,0:T(8,128)}', space=vmem, size = 0x2000, scoped, tag = 'scratch operand']
  #allocation13 [shape = 's32[]', space=sflag, size = 0x4, offset = 0, fixed_abs, tag = 'sflag constant byte address 0x0 - dummy sync flag']
  #allocation15 [shape = 's32[]', space=sflag, size = 0x4, offset = 0, fixed_abs, tag = 'sflag constant byte address 0x0 - dummy sync flag']
  #allocation17 [shape = 's32[]', space=sflag, size = 0x4, offset = 0, fixed_abs, tag = 'sflag constant byte address 0x0 - dummy sync flag']
  %s0 = inlined_call_operand.hbm [shape: bf16[8,32,32], index: 0, kind: input, shape index: {}]
  %s1 = inlined_call_operand.vmem [shape: s32[32,1], index: 1, kind: input, shape index: {}]
  %s2 = inlined_call_operand.vmem [shape: bf16[32,192], index: 2, kind: input, shape index: {}]
  %s3 = inlined_call_operand.vmem [shape: f32[1,192], index: 3, kind: input, shape index: {}]
  %s4 = inlined_call_operand.hbm [shape: bf16[64,192], index: 4, kind: input, shape index: {}]
  %s5 = inlined_call_operand.vmem [shape: f32[1,192], index: 5, kind: input, shape index: {}]
  %s6 = inlined_call_operand.hbm [shape: bf16[8,32,32], index: 6, kind: output, shape index: {0}]
  %s7 = inlined_call_operand.hbm [shape: bf16[8,32,32], index: 7, kind: output, shape index: {1}]
  %s8 = inlined_call_operand.hbm [shape: f32[32,64], index: 8, kind: output, shape index: {2}]
  %9 = xla_tuple %s6, %s7, %s8
  %s10 = sld [smem:[#allocation0]]
  $region88: #{tpu_custom_call.1} parent=0
    _
  %s12 = ssub.s32 1, %s10
  %s13 = scalar_select 0, %s12, %s10
  $region1: #{tpu_custom_call.1} parent=0
    #allocation4 [shape = 'u8[65536]{0}', space=vmem, size = 0x10000, scoped, tag = 'input window, operand 0']
    #allocation5 [shape = 's32[2]{0}', space=sflag, size = 0x8, scoped, tag = 'scoped memory for tpu_custom_call.1']
    #allocation6 [shape = 's32[2]{0}', space=sflag, size = 0x8, scoped, tag = 'scoped memory for tpu_custom_call.1']
    #allocation7 [shape = 'u8[32768]{0}', space=vmem, size = 0x8000, scoped, tag = 'input window, operand 4, single buffered']
    #allocation8 [shape = 's32[1]{0}', space=sflag, size = 0x4, scoped, tag = 'scoped memory for tpu_custom_call.1']
    #allocation9 [shape = 'u8[65536]{0}', space=vmem, size = 0x10000, scoped, tag = 'output window, operand 0']
    #allocation10 [shape = 'u8[65536]{0}', space=vmem, size = 0x10000, scoped, tag = 'output window, operand 1']
    #allocation11 [shape = 's32[2]{0}', space=sflag, size = 0x8, scoped, tag = 'scoped memory for tpu_custom_call.1']
    #allocation12 [shape = 'u8[16384]{0}', space=vmem, size = 0x4000, scoped, tag = 'output window, operand 2']
    %14 = vsyncpa [#allocation5], 0
    %s15 = scalar_lea.sflag [#allocation5], 1
    %16 = vsyncpa %s15, 0
    %17 = vsyncpa [#allocation8], 0
    %18 = vsyncpa [#allocation6], 0
    %s19 = scalar_lea.sflag [#allocation6], 1
    %20 = vsyncpa %s19, 0
    %21 = vsyncpa [#allocation11], 0
    %s22 = scalar_lea.sflag [#allocation11], 1
    %23 = vsyncpa %s22, 0
    loop: start=0, step=1, limit=4
    $region2: #{tpu_custom_call.1} parent=1 // loop_pre_header
      _
    $region3: #{tpu_custom_call.1} parent=1 // loop_header
      %s25 = sphi 0, %s29
      %p26 = scmp.ge.s32.totalorder %s25, 4
      %s35 = sphi 0, %s37
      %s38 = sphi 0, %s35
      %s39 = sphi 0, %s38
      %s55 = sphi 0, %s39
      %s61 = sphi 0, %s63
      %s64 = sphi 0, %s61
      %s65 = sphi 0, %s64
      %s81 = sphi 0, %s65
      %s85 = sphi 0, %s85
      %s87 = sphi 0, %s85
      %s88 = sphi 0, %s87
      %s102 = sphi 0, %s88
      %s106 = sphi 0, %s106
      %s108 = sphi 0, %s106
      %s109 = sphi 0, %s108
      %s123 = sphi 0, %s109
      %s127 = sphi 0, %s127
      %s129 = sphi 0, %s127
      %s130 = sphi 0, %s129
      %s144 = sphi 0, %s130
      %s148 = sphi 0, %s148
      %s150 = sphi 0, %s148
      %s151 = sphi 0, %s150
      %s165 = sphi 0, %s151
      %s171 = sphi 0, %s173
      %s174 = sphi 0, %s171
      %s175 = sphi 0, %s174
      %s191 = sphi 0, %s175
      %s197 = sphi 0, %s199
      %s200 = sphi 0, %s197
      %s201 = sphi 0, %s200
      %s217 = sphi 0, %s201
      %s223 = sphi 0, %s225
      %s226 = sphi 0, %s223
      %s227 = sphi 0, %s226
      %s243 = sphi 0, %s227
    $region4: #{tpu_custom_call.1} parent=1 // loop_header_branch
      %28 = sbr.rel (%p26) target = $region8
    $region5: #{tpu_custom_call.1} parent=1 // loop_body
      %s30 = ssub.s32 %s25, 1
      %s31 = ssub.s32 %s25, 2
      %s32 = sadd.s32 %s25, 1
      %s33 = ssub.s32 %s25, %s32
      %p34 = scmp.eq.s32.totalorder %s33, 0
      %s36 = sadd.s32 %s35, 1
      %s37 = scalar_select %p34, %s35, %s36
      %p40 = pneg %p34
      %p41 = scmp.eq.s32.totalorder %s25, 1
      %p42 = por %p40, %p41
      %p43 = scmp.ne.s32.totalorder %s35, %s38
      %p44 = scmp.eq.s32.totalorder %s25, 0
      %p45 = por %p43, %p44
      %p46 = scmp.ne.s32.totalorder %s35, %s38
      %p47 = scmp.eq.s32.totalorder %s30, 1
      %p48 = por %p46, %p47
      %p49 = scmp.ne.s32.totalorder %s38, %s39
      %p50 = scmp.eq.s32.totalorder %s30, 0
      %p51 = por %p49, %p50
      %p52 = scmp.ne.s32.totalorder %s38, %s39
      %p53 = scmp.eq.s32.totalorder %s31, 1
      %p54 = por %p52, %p53
      %p56 = scmp.ne.s32.totalorder %s39, %s55
      %p57 = scmp.eq.s32.totalorder %s31, 0
      %p58 = por %p56, %p57
      %s59 = ssub.s32 %s25, %s32
      %p60 = scmp.eq.s32.totalorder %s59, 0
      %s62 = sadd.s32 %s61, 1
      %s63 = scalar_select %p60, %s61, %s62
      %p66 = pneg %p60
      %p67 = scmp.eq.s32.totalorder %s25, 1
      %p68 = por %p66, %p67
      %p69 = scmp.ne.s32.totalorder %s61, %s64
      %p70 = scmp.eq.s32.totalorder %s25, 0
      %p71 = por %p69, %p70
      %p72 = scmp.ne.s32.totalorder %s61, %s64
      %p73 = scmp.eq.s32.totalorder %s30, 1
      %p74 = por %p72, %p73
      %p75 = scmp.ne.s32.totalorder %s64, %s65
      %p76 = scmp.eq.s32.totalorder %s30, 0
      %p77 = por %p75, %p76
      %p78 = scmp.ne.s32.totalorder %s64, %s65
      %p79 = scmp.eq.s32.totalorder %s31, 1
      %p80 = por %p78, %p79
      %p82 = scmp.ne.s32.totalorder %s65, %s81
      %p83 = scmp.eq.s32.totalorder %s31, 0
      %p84 = por %p82, %p83
      %s86 = sadd.s32 %s85, 1
      %p89 = scmp.eq.s32.totalorder %s25, 1
      %p90 = scmp.ne.s32.totalorder %s85, %s87
      %p91 = scmp.eq.s32.totalorder %s25, 0
      %p92 = por %p90, %p91
      %p93 = scmp.ne.s32.totalorder %s85, %s87
      %p94 = scmp.eq.s32.totalorder %s30, 1
      %p95 = por %p93, %p94
      %p96 = scmp.ne.s32.totalorder %s87, %s88
      %p97 = scmp.eq.s32.totalorder %s30, 0
      %p98 = por %p96, %p97
      %p99 = scmp.ne.s32.totalorder %s87, %s88
      %p100 = scmp.eq.s32.totalorder %s31, 1
      %p101 = por %p99, %p100
      %p103 = scmp.ne.s32.totalorder %s88, %s102
      %p104 = scmp.eq.s32.totalorder %s31, 0
      %p105 = por %p103, %p104
      %s107 = sadd.s32 %s106, 1
      %p110 = scmp.eq.s32.totalorder %s25, 1
      %p111 = scmp.ne.s32.totalorder %s106, %s108
      %p112 = scmp.eq.s32.totalorder %s25, 0
      %p113 = por %p111, %p112
      %p114 = scmp.ne.s32.totalorder %s106, %s108
      %p115 = scmp.eq.s32.totalorder %s30, 1
      %p116 = por %p114, %p115
      %p117 = scmp.ne.s32.totalorder %s108, %s109
      %p118 = scmp.eq.s32.totalorder %s30, 0
      %p119 = por %p117, %p118
      %p120 = scmp.ne.s32.totalorder %s108, %s109
      %p121 = scmp.eq.s32.totalorder %s31, 1
      %p122 = por %p120, %p121
      %p124 = scmp.ne.s32.totalorder %s109, %s123
      %p125 = scmp.eq.s32.totalorder %s31, 0
      %p126 = por %p124, %p125
      %s128 = sadd.s32 %s127, 1
      %p131 = scmp.eq.s32.totalorder %s25, 1
      %p132 = scmp.ne.s32.totalorder %s127, %s129
      %p133 = scmp.eq.s32.totalorder %s25, 0
      %p134 = por %p132, %p133
      %p135 = scmp.ne.s32.totalorder %s127, %s129
      %p136 = scmp.eq.s32.totalorder %s30, 1
      %p137 = por %p135, %p136
      %p138 = scmp.ne.s32.totalorder %s129, %s130
      %p139 = scmp.eq.s32.totalorder %s30, 0
      %p140 = por %p138, %p139
      %p141 = scmp.ne.s32.totalorder %s129, %s130
      %p142 = scmp.eq.s32.totalorder %s31, 1
      %p143 = por %p141, %p142
      %p145 = scmp.ne.s32.totalorder %s130, %s144
      %p146 = scmp.eq.s32.totalorder %s31, 0
      %p147 = por %p145, %p146
      %s149 = sadd.s32 %s148, 1
      %p152 = scmp.eq.s32.totalorder %s25, 1
      %p153 = scmp.ne.s32.totalorder %s148, %s150
      %p154 = scmp.eq.s32.totalorder %s25, 0
      %p155 = por %p153, %p154
      %p156 = scmp.ne.s32.totalorder %s148, %s150
      %p157 = scmp.eq.s32.totalorder %s30, 1
      %p158 = por %p156, %p157
      %p159 = scmp.ne.s32.totalorder %s150, %s151
      %p160 = scmp.eq.s32.totalorder %s30, 0
      %p161 = por %p159, %p160
      %p162 = scmp.ne.s32.totalorder %s150, %s151
      %p163 = scmp.eq.s32.totalorder %s31, 1
      %p164 = por %p162, %p163
      %p166 = scmp.ne.s32.totalorder %s151, %s165
      %p167 = scmp.eq.s32.totalorder %s31, 0
      %p168 = por %p166, %p167
      %s169 = ssub.s32 %s25, %s32
      %p170 = scmp.eq.s32.totalorder %s169, 0
      %s172 = sadd.s32 %s171, 1
      %s173 = scalar_select %p170, %s171, %s172
      %p176 = pneg %p170
      %p177 = scmp.eq.s32.totalorder %s25, 1
      %p178 = por %p176, %p177
      %p179 = scmp.ne.s32.totalorder %s171, %s174
      %p180 = scmp.eq.s32.totalorder %s25, 0
      %p181 = por %p179, %p180
      %p182 = scmp.ne.s32.totalorder %s171, %s174
      %p183 = scmp.eq.s32.totalorder %s30, 1
      %p184 = por %p182, %p183
      %p185 = scmp.ne.s32.totalorder %s174, %s175
      %p186 = scmp.eq.s32.totalorder %s30, 0
      %p187 = por %p185, %p186
      %p188 = scmp.ne.s32.totalorder %s174, %s175
      %p189 = scmp.eq.s32.totalorder %s31, 1
      %p190 = por %p188, %p189
      %p192 = scmp.ne.s32.totalorder %s175, %s191
      %p193 = scmp.eq.s32.totalorder %s31, 0
      %p194 = por %p192, %p193
      %s195 = ssub.s32 %s25, %s32
      %p196 = scmp.eq.s32.totalorder %s195, 0
      %s198 = sadd.s32 %s197, 1
      %s199 = scalar_select %p196, %s197, %s198
      %p202 = pneg %p196
      %p203 = scmp.eq.s32.totalorder %s25, 1
      %p204 = por %p202, %p203
      %p205 = scmp.ne.s32.totalorder %s197, %s200
      %p206 = scmp.eq.s32.totalorder %s25, 0
      %p207 = por %p205, %p206
      %p208 = scmp.ne.s32.totalorder %s197, %s200
      %p209 = scmp.eq.s32.totalorder %s30, 1
      %p210 = por %p208, %p209
      %p211 = scmp.ne.s32.totalorder %s200, %s201
      %p212 = scmp.eq.s32.totalorder %s30, 0
      %p213 = por %p211, %p212
      %p214 = scmp.ne.s32.totalorder %s200, %s201
      %p215 = scmp.eq.s32.totalorder %s31, 1
      %p216 = por %p214, %p215
      %p218 = scmp.ne.s32.totalorder %s201, %s217
      %p219 = scmp.eq.s32.totalorder %s31, 0
      %p220 = por %p218, %p219
      %s221 = ssub.s32 %s25, %s32
      %p222 = scmp.eq.s32.totalorder %s221, 0
      %s224 = sadd.s32 %s223, 1
      %s225 = scalar_select %p222, %s223, %s224
      %p228 = pneg %p222
      %p229 = scmp.eq.s32.totalorder %s25, 1
      %p230 = por %p228, %p229
      %p231 = scmp.ne.s32.totalorder %s223, %s226
      %p232 = scmp.eq.s32.totalorder %s25, 0
      %p233 = por %p231, %p232
      %p234 = scmp.ne.s32.totalorder %s223, %s226
      %p235 = scmp.eq.s32.totalorder %s30, 1
      %p236 = por %p234, %p235
      %p237 = scmp.ne.s32.totalorder %s226, %s227
      %p238 = scmp.eq.s32.totalorder %s30, 0
      %p239 = por %p237, %p238
      %p240 = scmp.ne.s32.totalorder %s226, %s227
      %p241 = scmp.eq.s32.totalorder %s31, 1
      %p242 = por %p240, %p241
      %p244 = scmp.ne.s32.totalorder %s227, %s243
      %p245 = scmp.eq.s32.totalorder %s31, 0
      %p246 = por %p244, %p245
      %p247 = scmp.le.s32.totalorder 1, %s25
      %p248 = scmp.lt.s32.totalorder %s25, 3
      %p249 = pnand %p247, %p248
      %p250 = pneg %p249
      // Predicated region
      $region9: #{tpu_custom_call.1} parent=5 // pred_check
        _
      $region10: #{tpu_custom_call.1} parent=5 // pred_check_branch
        %252 = sbr.rel (%p249) target = $region12
      $region11: #{tpu_custom_call.1} parent=5 // pred_region
        %s253 = ssub.s32 %s25, 1
        // Predicated region
        $region13: #{tpu_custom_call.1} parent=11 // pred_check
          %p254 = pneg %p98
        $region14: #{tpu_custom_call.1} parent=11 // pred_check_branch
          %256 = sbr.rel (%p254) target = $region16
        $region15: #{tpu_custom_call.1} parent=11 // pred_region
          _
        $region16: #{tpu_custom_call.1} parent=11 // pred_fallthru
          _
        // Predicated region
        $region17: #{tpu_custom_call.1} parent=11 // pred_check
          %p257 = pneg %p119
        $region18: #{tpu_custom_call.1} parent=11 // pred_check_branch
          %259 = sbr.rel (%p257) target = $region20
        $region19: #{tpu_custom_call.1} parent=11 // pred_region
          _
        $region20: #{tpu_custom_call.1} parent=11 // pred_fallthru
          _
        // Predicated region
        $region21: #{tpu_custom_call.1} parent=11 // pred_check
          %p260 = pneg %p140
        $region22: #{tpu_custom_call.1} parent=11 // pred_check_branch
          %262 = sbr.rel (%p260) target = $region24
        $region23: #{tpu_custom_call.1} parent=11 // pred_region
          %s264 = ssub.s32 1024, 1024
          %265 = vsyncadd [#allocation8], %s264
          %s266 = sshll.u32 [#allocation7], 4
          %s267 = int_to_ptr.vmem [resolvable:$true] %s266
          %272 = dma.hbm_to_vmem [thread:$0]  %s4, 1024, %s267, [#allocation8], 128, 128, 8
        $region24: #{tpu_custom_call.1} parent=11 // pred_fallthru
          _
        // Predicated region
        $region25: #{tpu_custom_call.1} parent=11 // pred_check
          %p273 = pneg %p161
        $region26: #{tpu_custom_call.1} parent=11 // pred_check_branch
          %275 = sbr.rel (%p273) target = $region28
        $region27: #{tpu_custom_call.1} parent=11 // pred_region
          _
        $region28: #{tpu_custom_call.1} parent=11 // pred_fallthru
          _
      $region12: #{tpu_custom_call.1} parent=5 // pred_fallthru
        _
      %p276 = scmp.lt.s32.totalorder %s25, 2
      // Predicated region
      $region29: #{tpu_custom_call.1} parent=5 // pred_check
        %p277 = pneg %p276
      $region30: #{tpu_custom_call.1} parent=5 // pred_check_branch
        %279 = sbr.rel (%p277) target = $region32
      $region31: #{tpu_custom_call.1} parent=5 // pred_region
        // Predicated region
        $region33: #{tpu_custom_call.1} parent=31 // pred_check
          %p280 = pneg %p45
        $region34: #{tpu_custom_call.1} parent=31 // pred_check_branch
          %282 = sbr.rel (%p280) target = $region36
        $region35: #{tpu_custom_call.1} parent=31 // pred_region
          #allocation14 [shape = 'u32[6]{0}', space=smem, size = 0x18, scoped, tag = 'DMA stride descriptor']
          %s283 = sand.u32 %s35, 1
          %s284 = scalar_lea.sflag [#allocation5], %s283
          %s285 = sand.u32 %s35, 1
          %s286 = smul.addr %s285, 64
          %s287 = scalar_lea.vmem [#allocation4], %s286
          %s288 = smul.u32 2, %s25
          %s290 = ssub.s32 1024, 1024
          %291 = vsyncadd %s284, %s290
          %s292 = smul.addr %s288, 64
          %s293 = scalar_lea.hbm %s0, %s292
          %s295 = sshll.u32 1, 14
          %s296 = sxor.u32 4294967295, %s295
          %s298 = sld [smem:[#allocation0]]
          %s299 = sadd.s32 2, %s298
          %s301 = sshll.u32 7, 26
          %s302 = sxor.u32 4294967295, %s301
          %s303 = sand.u32 0, %s302
          %s304 = sshll.u32 %s299, 26
          %s305 = sor.u32 %s303, %s304
          %s306 = sshll.u32 %s287, 4
          %s307 = int_to_ptr.vmem [resolvable:$true] %s306
          %313 = sst [smem:[#allocation14]] 256
          %s314 = scalar_lea.smem [#allocation14], 1
          %315 = sst [smem:[%s314]] 128
          %s316 = scalar_lea.smem [#allocation14], 2
          %317 = sst [smem:[%s316]] 2
          %s318 = scalar_lea.smem [#allocation14], 3
          %319 = sst [smem:[%s318]] 64
          %s320 = scalar_lea.smem [#allocation14], 4
          %321 = sst [smem:[%s320]] 64
          %s322 = scalar_lea.smem [#allocation14], 5
          %323 = sst [smem:[%s322]] 4
          %325 = dma.general %s293, 1024, %s307, %s284, 131072, [#allocation14], %s305, 0
        $region36: #{tpu_custom_call.1} parent=31 // pred_fallthru
          _
        // Predicated region
        $region37: #{tpu_custom_call.1} parent=31 // pred_check
          %p326 = pneg %p71
        $region38: #{tpu_custom_call.1} parent=31 // pred_check_branch
          %328 = sbr.rel (%p326) target = $region40
        $region39: #{tpu_custom_call.1} parent=31 // pred_region
          %s329 = smul.u32 2, %s25
          %p330 = scmp.lt.s32.totalorder %s329, 3
          %s331 = scalar_select %p330, %s329, 3
          %s332 = smul.addr %s331, 8
          %s333 = scalar_lea.vmem %s1, %s332
          %s334 = smul.u32 2, %s25
        $region40: #{tpu_custom_call.1} parent=31 // pred_fallthru
          _
      $region32: #{tpu_custom_call.1} parent=5 // pred_fallthru
        _
      %p335 = scmp.le.s32.totalorder 1, %s25
      %p336 = scmp.lt.s32.totalorder %s25, 3
      %p337 = pnand %p335, %p336
      %p338 = pneg %p337
      // Predicated region
      $region41: #{tpu_custom_call.1} parent=5 // pred_check
        _
      $region42: #{tpu_custom_call.1} parent=5 // pred_check_branch
        %340 = sbr.rel (%p337) target = $region44
      $region43: #{tpu_custom_call.1} parent=5 // pred_region
        %s341 = ssub.s32 %s25, 1
        %s342 = sand.u32 %s38, 1
        %s343 = scalar_lea.sflag [#allocation5], %s342
        %s344 = sand.u32 %s38, 1
        %s345 = smul.addr %s344, 64
        %s346 = scalar_lea.vmem [#allocation4], %s345
        // Predicated region
        $region45: #{tpu_custom_call.1} parent=43 // pred_check
          %p347 = pneg %p51
        $region46: #{tpu_custom_call.1} parent=43 // pred_check_branch
          %349 = sbr.rel (%p347) target = $region48
        $region47: #{tpu_custom_call.1} parent=43 // pred_region
          %350 = dma.done %s343, 1024
        $region48: #{tpu_custom_call.1} parent=43 // pred_fallthru
          _
        // Predicated region
        $region49: #{tpu_custom_call.1} parent=43 // pred_check
          %p351 = pneg %p140
        $region50: #{tpu_custom_call.1} parent=43 // pred_check_branch
          %353 = sbr.rel (%p351) target = $region52
        $region51: #{tpu_custom_call.1} parent=43 // pred_region
          %354 = dma.done [#allocation8], 1024
        $region52: #{tpu_custom_call.1} parent=43 // pred_fallthru
          _
        %s355 = sand.u32 %s38, 1
        %s356 = scalar_lea.sflag [#allocation5], %s355
        %s357 = sand.u32 %s38, 1
        %s358 = smul.addr %s357, 64
        %s359 = scalar_lea.vmem [#allocation4], %s358
        %p360 = pneg %p51
        %p361 = pneg %p48
        %s362 = smul.u32 2, %s30
        %p363 = scmp.lt.s32.totalorder %s362, 3
        %s364 = scalar_select %p363, %s362, 3
        %s365 = smul.addr %s364, 8
        %s366 = scalar_lea.vmem %s1, %s365
        %p367 = pneg %p77
        %p368 = pneg %p74
        %p369 = pneg %p98
        %p370 = pneg %p95
        %p371 = pneg %p119
        %p372 = pneg %p116
        %p373 = pneg %p140
        %p374 = pneg %p137
        %p375 = pneg %p161
        %p376 = pneg %p158
        %p377 = pneg %p187
        %p378 = pneg %p184
        %s379 = sand.u32 %s174, 1
        %s380 = scalar_lea.sflag [#allocation6], %s379
        %s381 = sand.u32 %s174, 1
        %s382 = smul.addr %s381, 64
        %s383 = scalar_lea.vmem [#allocation9], %s382
        %p384 = pneg %p213
        %p385 = pneg %p210
        %s386 = sand.u32 %s30, 1
        %s387 = scalar_lea.sflag [#allocation11], %s386
        %s388 = sand.u32 %s200, 1
        %s389 = smul.addr %s388, 64
        %s390 = scalar_lea.vmem [#allocation10], %s389
        %p391 = pneg %p239
        %p392 = pneg %p236
        %s393 = sand.u32 %s30, 1
        %s394 = scalar_lea.sflag [#allocation11], %s393
        %s395 = sand.u32 %s226, 1
        %s396 = smul.addr %s395, 16
        %s397 = scalar_lea.vmem [#allocation12], %s396
        %s398 = smul.u32 2, %s30
        %s399 = smul.u32 2, %s30
        %p400 = scmp.lt.s32.totalorder %s399, 3
        %s401 = scalar_select %p400, %s399, 3
        %s402 = smul.addr %s401, 8
        %s403 = scalar_lea.vmem %s1, %s402
        %s404 = smul.u32 2, %s30
        %s405 = smul.u32 2, %s30
        %s406 = smul.u32 2, %s30
        %s407 = smul.u32 2, %s30
        %v409 = vld [vmem:[%s346] sm:$0xf]
        %v410 = vld [vmem:[%s346 + $0x4] sm:$0xf]
        %v411 = vld [vmem:[%s346 + $0x8] sm:$0xf]
        %v412 = vld [vmem:[%s346 + $0xc] sm:$0xf]
        %v413 = vld [vmem:[%s346 + $0x10] sm:$0xf]
        %v414 = vld [vmem:[%s346 + $0x14] sm:$0xf]
        %v415 = vld [vmem:[%s346 + $0x18] sm:$0xf]
        %v416 = vld [vmem:[%s346 + $0x1c] sm:$0xf]
        %v417 = vld [vmem:[%s346 + $0x20] sm:$0xf]
        %v418 = vld [vmem:[%s346 + $0x24] sm:$0xf]
        %v419 = vld [vmem:[%s346 + $0x28] sm:$0xf]
        %v420 = vld [vmem:[%s346 + $0x2c] sm:$0xf]
        %v421 = vld [vmem:[%s346 + $0x30] sm:$0xf]
        %v422 = vld [vmem:[%s346 + $0x34] sm:$0xf]
        %v423 = vld [vmem:[%s346 + $0x38] sm:$0xf]
        %v424 = vld [vmem:[%s346 + $0x3c] sm:$0xf]
        %v425 = vld [vmem:[%s2] sm:$0xff]
        %v426 = vld [vmem:[%s2 + $0x8] sm:$0xff]
        %v427 = vld [vmem:[%s2 + $0x10] sm:$0xff]
        %v428 = vld [vmem:[%s2 + $0x18] sm:$0xff]
        %v429 = vld [vmem:[%s3] sm:$0x3]
        %v431 = vlaneseq
        %v432 = vshrl.u32 %v431, 7
        %v433 = vsub.s32 0, %v432
        %v434 = vrot.slane %v429, %v433
        %v435 = vlaneseq
        %v436 = vshrl.u32 %v435, 7
        %v437 = vsub.s32 1, %v436
        %v438 = vrot.slane %v429, %v437
        %v457 = vunpack.c.l.b16 %v409
        %v458 = vunpack.c.l.b16 %v410
        %v459 = vunpack.c.l.b16 %v411
        %v460 = vunpack.c.l.b16 %v412
        %v461 = vunpack.c.l.b16 %v413
        %v462 = vunpack.c.l.b16 %v414
        %v463 = vunpack.c.l.b16 %v415
        %v464 = vunpack.c.l.b16 %v416
        %v465 = vunpack.c.l.b16 %v417
        %v466 = vunpack.c.l.b16 %v418
        %v467 = vunpack.c.l.b16 %v419
        %v468 = vunpack.c.l.b16 %v420
        %v469 = vunpack.c.l.b16 %v421
        %v470 = vunpack.c.l.b16 %v422
        %v471 = vunpack.c.l.b16 %v423
        %v472 = vunpack.c.l.b16 %v424
        %v473 = vpack.c.b16 %v458, %v457
        %v474 = vpack.c.b16 %v460, %v459
        %v475 = vpack.c.b16 %v462, %v461
        %v476 = vpack.c.b16 %v464, %v463
        %v477 = vpack.c.b16 %v466, %v465
        %v478 = vpack.c.b16 %v468, %v467
        %v479 = vpack.c.b16 %v470, %v469
        %v480 = vpack.c.b16 %v472, %v471
        %v485 = vunpack.c.l.b16 %v425
        %v486 = vunpack.c.h.b16 %v425
        %v487 = vunpack.c.l.b16 %v426
        %v488 = vunpack.c.h.b16 %v426
        %v489 = vunpack.c.l.b16 %v427
        %v490 = vunpack.c.h.b16 %v427
        %v491 = vunpack.c.l.b16 %v428
        %v492 = vunpack.c.h.b16 %v428
        %v493 = vpack.c.b16 %v487, %v485
        %v494 = vpack.c.b16 %v488, %v486
        %v495 = vpack.c.b16 %v491, %v489
        %v496 = vpack.c.b16 %v492, %v490
        %vm501 = vcmask 261120
        %v503 = vsel %vm501, %v473, 0
        %v506 = vsel %vm501, %v474, 0
        %v509 = vsel %vm501, %v475, 0
        %v512 = vsel %vm501, %v476, 0
        %v515 = vsel %vm501, %v477, 0
        %v518 = vsel %vm501, %v478, 0
        %v521 = vsel %vm501, %v479, 0
        %v524 = vsel %vm501, %v480, 0
        %526 = vmatprep.subr.bf16.mxu0 0
        %527 = vmatpush1.bf16.msra.mxu0 0
        %528 = vmatprep.subr.bf16.mxu0 0
        %529 = vmatpush1.bf16.msra.mxu0 0
        %530 = vmatprep.subr.bf16.mxu0 0
        %531 = vmatpush1.bf16.msra.mxu0 0
        %532 = vmatprep.subr.bf16.mxu0 0
        %533 = vmatpush1.bf16.msra.mxu0 0
        %534 = vmatprep.subr.bf16.mxu0 0
        %535 = vmatpush1.bf16.msra.mxu0 0
        %536 = vmatprep.subr.bf16.mxu0 0
        %537 = vmatpush1.bf16.msra.mxu0 0
        %538 = vmatprep.subr.bf16.mxu0 %v496
        %539 = vmatpush1.bf16.msra.mxu0 %v495
        %540 = vmatprep.subr.bf16.mxu0 %v494
        %541 = vmatpush1.bf16.msra.mxu0 %v493
        %542 = vmatprep.subr.bf16.mxu0 0
        %543 = vmatpush2.bf16.msra.mxu0 0
        %544 = vmatprep.subr.bf16.mxu0 0
        %545 = vmatpush2.bf16.msra.mxu0 0
        %546 = vmatprep.subr.bf16.mxu0 0
        %547 = vmatpush2.bf16.msra.mxu0 0
        %548 = vmatprep.subr.bf16.mxu0 0
        %549 = vmatpush2.bf16.msra.mxu0 0
        %550 = vmatprep.subr.bf16.mxu0 0
        %551 = vmatpush2.bf16.msra.mxu0 0
        %552 = vmatprep.subr.bf16.mxu0 0
        %553 = vmatpush2.bf16.msra.mxu0 0
        %554 = vmatprep.subr.bf16.mxu0 0
        %555 = vmatpush2.bf16.msra.mxu0 0
        %556 = vmatprep.subr.bf16.mxu0 0
        %557 = vmatpush2.bf16.msra.mxu0 0
        %558 = vmatprep.mubr.bf16.mxu0 0
        %559 = vmatmul.mubr.bf16.gmra.mxu0 %v503
        %v560 = vpop.f32.mrf.mxu0
        %v561 = vadd.f32 %v434, %v560
        %v562 = vpop.f32.mrf.mxu0
        %v563 = vadd.f32 %v438, %v562
        %v564 = vpop.f32.mrf.mxu0
        %v565 = vadd.f32 %v434, %v564
        %v566 = vpop.f32.mrf.mxu0
        %v567 = vadd.f32 %v438, %v566
        %568 = vmatprep.mubr.bf16.mxu0 0
        %569 = vmatmul.mubr.bf16.gmra.mxu0 %v506
        %v570 = vpop.f32.mrf.mxu0
        %v571 = vadd.f32 %v434, %v570
        %v572 = vpop.f32.mrf.mxu0
        %v573 = vadd.f32 %v438, %v572
        %v574 = vpop.f32.mrf.mxu0
        %v575 = vadd.f32 %v434, %v574
        %v576 = vpop.f32.mrf.mxu0
        %v577 = vadd.f32 %v438, %v576
        %578 = vmatprep.mubr.bf16.mxu0 0
        %579 = vmatmul.mubr.bf16.gmra.mxu0 %v509
        %v580 = vpop.f32.mrf.mxu0
        %v581 = vadd.f32 %v434, %v580
        %v582 = vpop.f32.mrf.mxu0
        %v583 = vadd.f32 %v438, %v582
        %v584 = vpop.f32.mrf.mxu0
        %v585 = vadd.f32 %v434, %v584
        %v586 = vpop.f32.mrf.mxu0
        %v587 = vadd.f32 %v438, %v586
        %588 = vmatprep.mubr.bf16.mxu0 0
        %589 = vmatmul.mubr.bf16.gmra.mxu0 %v512
        %v590 = vpop.f32.mrf.mxu0
        %v591 = vadd.f32 %v434, %v590
        %v592 = vpop.f32.mrf.mxu0
        %v593 = vadd.f32 %v438, %v592
        %v594 = vpop.f32.mrf.mxu0
        %v595 = vadd.f32 %v434, %v594
        %v596 = vpop.f32.mrf.mxu0
        %v597 = vadd.f32 %v438, %v596
        %598 = vmatprep.mubr.bf16.mxu0 0
        %599 = vmatmul.mubr.bf16.gmra.mxu0 %v515
        %v600 = vpop.f32.mrf.mxu0
        %v601 = vadd.f32 %v434, %v600
        %v602 = vpop.f32.mrf.mxu0
        %v603 = vadd.f32 %v438, %v602
        %v604 = vpop.f32.mrf.mxu0
        %v605 = vadd.f32 %v434, %v604
        %v606 = vpop.f32.mrf.mxu0
        %v607 = vadd.f32 %v438, %v606
        %608 = vmatprep.mubr.bf16.mxu0 0
        %609 = vmatmul.mubr.bf16.gmra.mxu0 %v518
        %v610 = vpop.f32.mrf.mxu0
        %v611 = vadd.f32 %v434, %v610
        %v612 = vpop.f32.mrf.mxu0
        %v613 = vadd.f32 %v438, %v612
        %v614 = vpop.f32.mrf.mxu0
        %v615 = vadd.f32 %v434, %v614
        %v616 = vpop.f32.mrf.mxu0
        %v617 = vadd.f32 %v438, %v616
        %618 = vmatprep.mubr.bf16.mxu0 0
        %619 = vmatmul.mubr.bf16.gmra.mxu0 %v521
        %v620 = vpop.f32.mrf.mxu0
        %v621 = vadd.f32 %v434, %v620
        %v622 = vpop.f32.mrf.mxu0
        %v623 = vadd.f32 %v438, %v622
        %v624 = vpop.f32.mrf.mxu0
        %v625 = vadd.f32 %v434, %v624
        %v626 = vpop.f32.mrf.mxu0
        %v627 = vadd.f32 %v438, %v626
        %628 = vmatprep.mubr.bf16.mxu0 0
        %629 = vmatmul.mubr.bf16.gmra.mxu0 %v524
        %v630 = vpop.f32.mrf.mxu0
        %v631 = vadd.f32 %v434, %v630
        %v632 = vpop.f32.mrf.mxu0
        %v633 = vadd.f32 %v438, %v632
        %v634 = vpop.f32.mrf.mxu0
        %v635 = vadd.f32 %v434, %v634
        %v636 = vpop.f32.mrf.mxu0
        %v637 = vadd.f32 %v438, %v636
        %638 = vdwg.mxu0
        %v639 = vpack.c.bf16 %v565, %v561
        %v640 = vpack.c.bf16 %v567, %v563
        %v641 = vpack.c.bf16 %v575, %v571
        %v642 = vpack.c.bf16 %v577, %v573
        %v643 = vpack.c.bf16 %v585, %v581
        %v644 = vpack.c.bf16 %v587, %v583
        %v645 = vpack.c.bf16 %v595, %v591
        %v646 = vpack.c.bf16 %v597, %v593
        %v647 = vpack.c.bf16 %v605, %v601
        %v648 = vpack.c.bf16 %v607, %v603
        %v649 = vpack.c.bf16 %v615, %v611
        %v650 = vpack.c.bf16 %v617, %v613
        %v651 = vpack.c.bf16 %v625, %v621
        %v652 = vpack.c.bf16 %v627, %v623
        %v653 = vpack.c.bf16 %v635, %v631
        %v654 = vpack.c.bf16 %v637, %v633
        %v671 = vunpack.c.l.b16 %v639
        %v672 = vunpack.c.l.b16 %v640
        %v673 = vunpack.c.h.b16 %v639
        %v674 = vunpack.c.h.b16 %v640
        %v675 = vunpack.c.l.b16 %v641
        %v676 = vunpack.c.l.b16 %v642
        %v677 = vunpack.c.h.b16 %v641
        %v678 = vunpack.c.h.b16 %v642
        %v679 = vunpack.c.l.b16 %v643
        %v680 = vunpack.c.l.b16 %v644
        %v681 = vunpack.c.h.b16 %v643
        %v682 = vunpack.c.h.b16 %v644
        %v683 = vunpack.c.l.b16 %v645
        %v684 = vunpack.c.l.b16 %v646
        %v685 = vunpack.c.h.b16 %v645
        %v686 = vunpack.c.h.b16 %v646
        %v687 = vunpack.c.l.b16 %v647
        %v688 = vunpack.c.l.b16 %v648
        %v689 = vunpack.c.h.b16 %v647
        %v690 = vunpack.c.h.b16 %v648
        %v691 = vunpack.c.l.b16 %v649
        %v692 = vunpack.c.l.b16 %v650
        %v693 = vunpack.c.h.b16 %v649
        %v694 = vunpack.c.h.b16 %v650
        %v695 = vunpack.c.l.b16 %v651
        %v696 = vunpack.c.l.b16 %v652
        %v697 = vunpack.c.h.b16 %v651
        %v698 = vunpack.c.h.b16 %v652
        %v699 = vunpack.c.l.b16 %v653
        %v700 = vunpack.c.l.b16 %v654
        %v701 = vunpack.c.h.b16 %v653
        %v702 = vunpack.c.h.b16 %v654
        %v703 = vpack.c.b16 %v672, %v671
        %v704 = vpack.c.b16 %v674, %v673
        %v705 = vpack.c.b16 %v676, %v675
        %v706 = vpack.c.b16 %v678, %v677
        %v707 = vpack.c.b16 %v680, %v679
        %v708 = vpack.c.b16 %v682, %v681
        %v709 = vpack.c.b16 %v684, %v683
        %v710 = vpack.c.b16 %v686, %v685
        %v711 = vpack.c.b16 %v688, %v687
        %v712 = vpack.c.b16 %v690, %v689
        %v713 = vpack.c.b16 %v692, %v691
        %v714 = vpack.c.b16 %v694, %v693
        %v715 = vpack.c.b16 %v696, %v695
        %v716 = vpack.c.b16 %v698, %v697
        %v717 = vpack.c.b16 %v700, %v699
        %v718 = vpack.c.b16 %v702, %v701
        %vm735 = vcmask 1043456
        %vm736 = vcmask 523268
        %vm737 = vmor %vm736, %vm735
        %738 = vst.msk [vmem:[#allocation2] sm:$0xff] %vm737, %v703
        %739 = vst.msk [vmem:[#allocation2 + $0x8] sm:$0xff] %vm737, %v704
        %740 = vst.msk [vmem:[#allocation2 + $0x10] sm:$0xff] %vm737, %v705
        %741 = vst.msk [vmem:[#allocation2 + $0x18] sm:$0xff] %vm737, %v706
        %742 = vst.msk [vmem:[#allocation2 + $0x20] sm:$0xff] %vm737, %v707
        %743 = vst.msk [vmem:[#allocation2 + $0x28] sm:$0xff] %vm737, %v708
        %744 = vst.msk [vmem:[#allocation2 + $0x30] sm:$0xff] %vm737, %v709
        %745 = vst.msk [vmem:[#allocation2 + $0x38] sm:$0xff] %vm737, %v710
        %746 = vst.msk [vmem:[#allocation2 + $0x40] sm:$0xff] %vm737, %v711
        %747 = vst.msk [vmem:[#allocation2 + $0x48] sm:$0xff] %vm737, %v712
        %748 = vst.msk [vmem:[#allocation2 + $0x50] sm:$0xff] %vm737, %v713
        %749 = vst.msk [vmem:[#allocation2 + $0x58] sm:$0xff] %vm737, %v714
        %750 = vst.msk [vmem:[#allocation2 + $0x60] sm:$0xff] %vm737, %v715
        %751 = vst.msk [vmem:[#allocation2 + $0x68] sm:$0xff] %vm737, %v716
        %752 = vst.msk [vmem:[#allocation2 + $0x70] sm:$0xff] %vm737, %v717
        %753 = vst.msk [vmem:[#allocation2 + $0x78] sm:$0xff] %vm737, %v718
        %v754 = vld [vmem:[#allocation7] sm:$0xff]
        %v755 = vld [vmem:[#allocation7 + $0x8] sm:$0xff]
        %v756 = vld [vmem:[#allocation7 + $0x10] sm:$0xff]
        %v757 = vld [vmem:[#allocation7 + $0x18] sm:$0xff]
        %v758 = vld [vmem:[#allocation7 + $0x20] sm:$0xff]
        %v759 = vld [vmem:[#allocation7 + $0x28] sm:$0xff]
        %v760 = vld [vmem:[#allocation7 + $0x30] sm:$0xff]
        %v761 = vld [vmem:[#allocation7 + $0x38] sm:$0xff]
        %v762 = vld [vmem:[%s5] sm:$0x3]
        %v763 = vld [vmem:[%s403] sm:$0xff]
        %v764 = vld [vmem:[%s403 + $0x8] sm:$0xff]
        %vm765 = vcmask 523264
        %766 = vst.msk [vmem:[#allocation3] sm:$0xff] %vm765, 0.0
        %767 = vst.msk [vmem:[#allocation3 + $0x8] sm:$0xff] %vm765, 0.0
        loop: start=0, step=1, limit=8
        $region53: #{tpu_custom_call.1} parent=43 // loop_pre_header
          _
        $region54: #{tpu_custom_call.1} parent=43 // loop_header
          %s769 = sphi 0, %s773
          %p770 = scmp.ge.s32.totalorder %s769, 8
        $region55: #{tpu_custom_call.1} parent=43 // loop_header_branch
          %772 = sbr.rel (%p770) target = $region59
        $region56: #{tpu_custom_call.1} parent=43 // loop_body
          %s774 = ssub.s32 7, %s769
          %v775 = vld [vmem:[#allocation3] sm:$0xff]
          %v776 = vld [vmem:[#allocation3 + $0x8] sm:$0xff]
          %v777 = vpack.c.bf16 %v776, %v775
          %v779 = vlaneseq
          %v780 = vshrl.u32 %v779, 7
          %v781 = vsub.s32 0, %v780
          %v782 = vrot.slane %v762, %v781
          %v783 = vlaneseq
          %v784 = vshrl.u32 %v783, 7
          %v785 = vsub.s32 1, %v784
          %v786 = vrot.slane %v762, %v785
          %v797 = vunpack.c.l.b16 %v754
          %v798 = vunpack.c.h.b16 %v754
          %v799 = vunpack.c.l.b16 %v755
          %v800 = vunpack.c.h.b16 %v755
          %v801 = vunpack.c.l.b16 %v756
          %v802 = vunpack.c.h.b16 %v756
          %v803 = vunpack.c.l.b16 %v757
          %v804 = vunpack.c.h.b16 %v757
          %v805 = vunpack.c.l.b16 %v758
          %v806 = vunpack.c.h.b16 %v758
          %v807 = vunpack.c.l.b16 %v759
          %v808 = vunpack.c.h.b16 %v759
          %v809 = vunpack.c.l.b16 %v760
          %v810 = vunpack.c.h.b16 %v760
          %v811 = vunpack.c.l.b16 %v761
          %v812 = vunpack.c.h.b16 %v761
          %v813 = vpack.c.b16 %v799, %v797
          %v814 = vpack.c.b16 %v800, %v798
          %v815 = vpack.c.b16 %v803, %v801
          %v816 = vpack.c.b16 %v804, %v802
          %v817 = vpack.c.b16 %v807, %v805
          %v818 = vpack.c.b16 %v808, %v806
          %v819 = vpack.c.b16 %v811, %v809
          %v820 = vpack.c.b16 %v812, %v810
          %v830 = vsel %vm765, %v777, 0
          %832 = vmatprep.subr.bf16.mxu0 0
          %833 = vmatpush1.bf16.msra.mxu0 0
          %834 = vmatprep.subr.bf16.mxu0 0
          %835 = vmatpush1.bf16.msra.mxu0 0
          %836 = vmatprep.subr.bf16.mxu0 0
          %837 = vmatpush1.bf16.msra.mxu0 0
          %838 = vmatprep.subr.bf16.mxu0 0
          %839 = vmatpush1.bf16.msra.mxu0 0
          %840 = vmatprep.subr.bf16.mxu0 %v820
          %841 = vmatpush1.bf16.msra.mxu0 %v819
          %842 = vmatprep.subr.bf16.mxu0 %v818
          %843 = vmatpush1.bf16.msra.mxu0 %v817
          %844 = vmatprep.subr.bf16.mxu0 %v816
          %845 = vmatpush1.bf16.msra.mxu0 %v815
          %846 = vmatprep.subr.bf16.mxu0 %v814
          %847 = vmatpush1.bf16.msra.mxu0 %v813
          %848 = vmatprep.subr.bf16.mxu0 0
          %849 = vmatpush2.bf16.msra.mxu0 0
          %850 = vmatprep.subr.bf16.mxu0 0
          %851 = vmatpush2.bf16.msra.mxu0 0
          %852 = vmatprep.subr.bf16.mxu0 0
          %853 = vmatpush2.bf16.msra.mxu0 0
          %854 = vmatprep.subr.bf16.mxu0 0
          %855 = vmatpush2.bf16.msra.mxu0 0
          %856 = vmatprep.subr.bf16.mxu0 0
          %857 = vmatpush2.bf16.msra.mxu0 0
          %858 = vmatprep.subr.bf16.mxu0 0
          %859 = vmatpush2.bf16.msra.mxu0 0
          %860 = vmatprep.subr.bf16.mxu0 0
          %861 = vmatpush2.bf16.msra.mxu0 0
          %862 = vmatprep.subr.bf16.mxu0 0
          %863 = vmatpush2.bf16.msra.mxu0 0
          %864 = vmatprep.mubr.bf16.mxu0 0
          %865 = vmatmul.mubr.bf16.gmra.mxu0 %v830
          %v866 = vpop.f32.mrf.mxu0
          %v867 = vadd.f32 %v782, %v866
          %v868 = vpop.f32.mrf.mxu0
          %v869 = vadd.f32 %v786, %v868
          %v870 = vpop.f32.mrf.mxu0
          %v871 = vadd.f32 %v782, %v870
          %v872 = vpop.f32.mrf.mxu0
          %v873 = vadd.f32 %v786, %v872
          %874 = vdwg.mxu0
          %s875 = smul.u32 %s769, 4
          %s876 = smul.addr %s875, 4
          %s877 = scalar_lea.vmem [#allocation2], %s876
          %v878 = vld [vmem:[%s877] sm:$0xff]
          %v879 = vld [vmem:[%s877 + $0x8] sm:$0xff]
          %s880 = smul.u32 %s774, 4
          %s881 = smul.addr %s880, 4
          %s882 = scalar_lea.vmem [#allocation2], %s881
          %v883 = vld [vmem:[%s882] sm:$0xff]
          %v884 = vld [vmem:[%s882 + $0x8] sm:$0xff]
          %v885 = vunpack.c.l.bf16 %v878
          %v886 = vunpack.c.l.bf16 %v879
          %v887 = vadd.f32 %v885, %v867
          %v888 = vadd.f32 %v886, %v871
          %v889 = vxor.u32 %v887, 2147483648
          %v890 = vxor.u32 %v888, 2147483648
          %v891 = vmul.f32 %v889, 1.442695
          %v892 = vpow.pop %v891
          %v893 = vmul.f32 %v890, 1.442695
          %v894 = vpow.pop %v893
          %v895 = vadd.f32 %v892, 1.0
          %v896 = vadd.f32 %v894, 1.0
          %v897 = vrcp.pop %v895
          %v898 = vmul.f32 1.0, %v897
          %v899 = vrcp.pop %v896
          %v900 = vmul.f32 1.0, %v899
          %903 = vrot.lane.b32.xlu0 %v867, 64
          %v904 = vpop.permute.xlu0 %903
          %905 = vrot.lane.b32.xlu0 %v871, 64
          %v906 = vpop.permute.xlu0 %905
          %v909 = vmul.f32 %v898, %v904
          %v910 = vmul.f32 %v900, %v906
          %913 = vrot.lane.b32.xlu0 %v909, 64
          %v914 = vpop.permute.xlu0 %913
          %915 = vrot.lane.b32.xlu0 %v910, 64
          %v916 = vpop.permute.xlu0 %915
          %v919 = vadd.f32 %v885, %v914
          %v920 = vadd.f32 %v886, %v916
          %v921 = vtanh.pop %v919
          %v922 = vtanh.pop %v920
          %v923 = vsub.f32 1.0, %v898
          %v924 = vsub.f32 1.0, %v900
          %927 = vrot.lane.b32.xlu0 %v921, 96
          %v928 = vpop.permute.xlu0 %927
          %929 = vrot.lane.b32.xlu0 %v922, 96
          %v930 = vpop.permute.xlu0 %929
          %v933 = vmul.f32 %v923, %v928
          %v934 = vmul.f32 %v924, %v930
          %937 = vrot.lane.b32.xlu0 %v775, 32
          %v938 = vpop.permute.xlu0 %937
          %939 = vrot.lane.b32.xlu0 %v776, 32
          %v940 = vpop.permute.xlu0 %939
          %v943 = vmul.f32 %v898, %v938
          %v944 = vmul.f32 %v900, %v940
          %v945 = vadd.f32 %v933, %v943
          %v946 = vadd.f32 %v934, %v944
          %v947 = vstv %s769
          %vm948 = vcmp.lt.s32.totalorder %v947, %v763
          %vm949 = vcmp.lt.s32.totalorder %v947, %v764
          %v950 = vsel %vm948, 1, 0
          %v951 = vsel %vm949, 1, 0
          %952 = vset.pattern.permute.xlu0 0
          %953 = vperm.xlu0 %952, %v950
          %v954 = vpop.permute.xlu0 %953
          %955 = vset.pattern.permute.xlu0 0
          %956 = vperm.xlu0 %955, %v951
          %v957 = vpop.permute.xlu0 %956
          %vm958 = vcmp.eq.s32.totalorder %v954, 1
          %vm959 = vcmp.eq.s32.totalorder %v957, 1
          %v960 = vsel %vm958, %v945, %v938
          %v961 = vsel %vm959, %v946, %v940
          %964 = vrot.lane.b32.xlu0 %v960, 96
          %v965 = vpop.permute.xlu0 %964
          %966 = vrot.lane.b32.xlu0 %v961, 96
          %v967 = vpop.permute.xlu0 %966
          %970 = vst.msk [vmem:[#allocation3] sm:$0xff] %vm501, %v965
          %971 = vst.msk [vmem:[#allocation3 + $0x8] sm:$0xff] %vm501, %v967
          %v972 = vsel %vm958, %v945, 0.0
          %v973 = vsel %vm959, %v946, 0.0
          %v974 = vpack.c.bf16 %v973, %v972
          %v976 = vunpack.c.l.b16 %v974
          %v977 = vunpack.c.h.b16 %v974
          %v978 = vpack.c.b16 %v976, %v976
          %v979 = vpack.c.b16 %v977, %v977
          %980 = vrot.lane.b32.xlu0 %v978, 96
          %v981 = vpop.permute.xlu0 %980
          %982 = vrot.lane.b32.xlu0 %v979, 96
          %v983 = vpop.permute.xlu0 %982
          %s986 = smul.u32 %s769, 2
          %s987 = smul.addr %s986, 4
          %s988 = scalar_lea.vmem %s383, %s987 [#allocation9]
          %vm989 = vcmask 257024
          %990 = vst.msk [vmem:[%s988] sm:$0xf] %vm989, %v981
          %991 = vst.msk [vmem:[%s988 + $0x4] sm:$0xf] %vm989, %v983
          %v992 = vunpack.c.l.bf16 %v883
          %v993 = vunpack.c.h.bf16 %v883
          %v994 = vunpack.c.l.bf16 %v884
          %v995 = vunpack.c.h.bf16 %v884
          %v996 = vadd.f32 %v992, %v867
          %v997 = vadd.f32 %v993, %v869
          %v998 = vadd.f32 %v994, %v871
          %v999 = vadd.f32 %v995, %v873
          %v1000 = vxor.u32 %v996, 2147483648
          %v1001 = vxor.u32 %v997, 2147483648
          %v1002 = vxor.u32 %v998, 2147483648
          %v1003 = vxor.u32 %v999, 2147483648
          %v1004 = vmul.f32 %v1000, 1.442695
          %v1005 = vpow.pop %v1004
          %v1006 = vmul.f32 %v1001, 1.442695
          %v1007 = vpow.pop %v1006
          %v1008 = vmul.f32 %v1002, 1.442695
          %v1009 = vpow.pop %v1008
          %v1010 = vmul.f32 %v1003, 1.442695
          %v1011 = vpow.pop %v1010
          %v1012 = vadd.f32 %v1005, 1.0
          %v1013 = vadd.f32 %v1007, 1.0
          %v1014 = vadd.f32 %v1009, 1.0
          %v1015 = vadd.f32 %v1011, 1.0
          %v1016 = vrcp.pop %v1012
          %v1017 = vmul.f32 1.0, %v1016
          %v1018 = vrcp.pop %v1013
          %v1019 = vmul.f32 1.0, %v1018
          %v1020 = vrcp.pop %v1014
          %v1021 = vmul.f32 1.0, %v1020
          %v1022 = vrcp.pop %v1015
          %v1023 = vmul.f32 1.0, %v1022
          %1026 = vrot.lane.b32.xlu0 %v869, 64
          %v1027 = vpop.permute.xlu0 %1026
          %1028 = vrot.lane.b32.xlu0 %v873, 64
          %v1029 = vpop.permute.xlu0 %1028
          %v1032 = vmul.f32 %v1017, %v1027
          %v1033 = vmul.f32 %v1021, %v1029
          %1036 = vrot.lane.b32.xlu0 %v883, 96
          %v1037 = vpop.permute.xlu0 %1036
          %1038 = vrot.lane.b32.xlu0 %v884, 96
          %v1039 = vpop.permute.xlu0 %1038
          %v1040 = vrot.slane %v1037, 4
          %v1041 = vrot.slane %v1039, 4
          %v1044 = vunpack.c.l.bf16 %v1040
          %v1045 = vunpack.c.l.bf16 %v1041
          %1048 = vrot.lane.b32.xlu0 %v1032, 32
          %v1049 = vpop.permute.xlu0 %1048
          %1050 = vrot.lane.b32.xlu0 %v1033, 32
          %v1051 = vpop.permute.xlu0 %1050
          %v1054 = vadd.f32 %v1044, %v1049
          %v1055 = vadd.f32 %v1045, %v1051
          %v1056 = vtanh.pop %v1054
          %v1057 = vtanh.pop %v1055
          %v1058 = vsub.f32 1.0, %v1019
          %v1059 = vsub.f32 1.0, %v1023
          %v1060 = vmul.f32 %v1058, %v1056
          %v1061 = vmul.f32 %v1059, %v1057
          %1062 = vrot.lane.b32.xlu0 %v775, 96
          %v1063 = vpop.permute.xlu0 %1062
          %1064 = vrot.lane.b32.xlu0 %v776, 96
          %v1065 = vpop.permute.xlu0 %1064
          %v1068 = vmul.f32 %v1019, %v1063
          %v1069 = vmul.f32 %v1023, %v1065
          %v1070 = vadd.f32 %v1060, %v1068
          %v1071 = vadd.f32 %v1061, %v1069
          %v1072 = vstv %s774
          %vm1073 = vcmp.lt.s32.totalorder %v1072, %v763
          %vm1074 = vcmp.lt.s32.totalorder %v1072, %v764
          %v1075 = vsel %vm1073, 1, 0
          %v1076 = vsel %vm1074, 1, 0
          %1077 = vset.pattern.permute.xlu0 0
          %1078 = vperm.xlu0 %1077, %v1075
          %v1079 = vpop.permute.xlu0 %1078
          %1080 = vset.pattern.permute.xlu0 0
          %1081 = vperm.xlu0 %1080, %v1076
          %v1082 = vpop.permute.xlu0 %1081
          %vm1083 = vcmp.eq.s32.totalorder %v1079, 1
          %vm1084 = vcmp.eq.s32.totalorder %v1082, 1
          %v1085 = vsel %vm1083, %v1070, %v1063
          %v1086 = vsel %vm1084, %v1071, %v1065
          %1089 = vrot.lane.b32.xlu0 %v1085, 32
          %v1090 = vpop.permute.xlu0 %1089
          %1091 = vrot.lane.b32.xlu0 %v1086, 32
          %v1092 = vpop.permute.xlu0 %1091
          %vm1095 = vcmask 523520
          %1096 = vst.msk [vmem:[#allocation3] sm:$0xff] %vm1095, %v1090
          %1097 = vst.msk [vmem:[#allocation3 + $0x8] sm:$0xff] %vm1095, %v1092
          %v1098 = vsel %vm1083, %v1070, 0.0
          %v1099 = vsel %vm1084, %v1071, 0.0
          %v1100 = vpack.c.bf16 %v1099, %v1098
          %v1102 = vunpack.c.l.b16 %v1100
          %v1103 = vunpack.c.h.b16 %v1100
          %v1104 = vpack.c.b16 %v1102, %v1102
          %v1105 = vpack.c.b16 %v1103, %v1103
          %s1108 = smul.u32 %s774, 2
          %s1109 = smul.addr %s1108, 4
          %s1110 = scalar_lea.vmem %s390, %s1109 [#allocation10]
          %1111 = vst.msk [vmem:[%s1110] sm:$0xf] %vm989, %v1104
          %1112 = vst.msk [vmem:[%s1110 + $0x4] sm:$0xf] %vm989, %v1105
        $region57: #{tpu_custom_call.1} parent=43 // loop_footer
          %s773 = sadd.s32 1, %s769
        $region58: #{tpu_custom_call.1} parent=43 // loop_footer_branch
          %768 = sbr.rel target = $region54
        $region59: #{tpu_custom_call.1} parent=43 // loop_exit
          _
        %v1113 = vld [vmem:[#allocation3] sm:$0xff]
        %v1114 = vld [vmem:[#allocation3 + $0x8] sm:$0xff]
        %1115 = vst.msk [vmem:[%s397] sm:$0xff] %vm765, %v1113
        %1116 = vst.msk [vmem:[%s397 + $0x8] sm:$0xff] %vm765, %v1114
        %s1117 = sand.u32 %s174, 1
        %s1118 = scalar_lea.sflag [#allocation6], %s1117
        %s1119 = sand.u32 %s174, 1
        %s1120 = smul.addr %s1119, 64
        %s1121 = scalar_lea.vmem [#allocation9], %s1120
        %s1122 = sand.u32 %s30, 1
        %s1123 = scalar_lea.sflag [#allocation11], %s1122
        %s1124 = sand.u32 %s200, 1
        %s1125 = smul.addr %s1124, 64
        %s1126 = scalar_lea.vmem [#allocation10], %s1125
        %s1127 = sand.u32 %s30, 1
        %s1128 = scalar_lea.sflag [#allocation11], %s1127
        %s1129 = sand.u32 %s226, 1
        %s1130 = smul.addr %s1129, 16
        %s1131 = scalar_lea.vmem [#allocation12], %s1130
        // Predicated region
        $region60: #{tpu_custom_call.1} parent=43 // pred_check
          %p1132 = pneg %p184
        $region61: #{tpu_custom_call.1} parent=43 // pred_check_branch
          %1134 = sbr.rel (%p1132) target = $region63
        $region62: #{tpu_custom_call.1} parent=43 // pred_region
          #allocation16 [shape = 'u32[6]{0}', space=smem, size = 0x18, scoped, tag = 'DMA stride descriptor']
          %s1135 = smul.u32 2, %s30
          %s1137 = ssub.s32 1024, 1024
          %1138 = vsyncadd %s1118, %s1137
          %s1139 = smul.addr %s1135, 64
          %s1140 = scalar_lea.hbm %s6, %s1139
          %s1142 = sshll.u32 1, 14
          %s1143 = sxor.u32 4294967295, %s1142
          %s1146 = sshll.u32 7, 18
          %s1147 = sxor.u32 4294967295, %s1146
          %s1148 = sand.u32 0, %s1147
          %s1150 = sor.u32 %s1148, 0
          %s1151 = sshll.u32 %s1121, 4
          %s1152 = int_to_ptr.vmem [resolvable:$true] %s1151
          %1158 = sst [smem:[#allocation16]] 128
          %s1159 = scalar_lea.smem [#allocation16], 1
          %1160 = sst [smem:[%s1159]] 256
          %s1161 = scalar_lea.smem [#allocation16], 2
          %1162 = sst [smem:[%s1161]] 2
          %s1163 = scalar_lea.smem [#allocation16], 3
          %1164 = sst [smem:[%s1163]] 64
          %s1165 = scalar_lea.smem [#allocation16], 4
          %1166 = sst [smem:[%s1165]] 64
          %s1167 = scalar_lea.smem [#allocation16], 5
          %1168 = sst [smem:[%s1167]] 4
          %1170 = dma.general %s1152, 1024, %s1140, %s1118, 131072, [#allocation16], %s1150, 0
        $region63: #{tpu_custom_call.1} parent=43 // pred_fallthru
          _
        // Predicated region
        $region64: #{tpu_custom_call.1} parent=43 // pred_check
          %p1171 = pneg %p210
        $region65: #{tpu_custom_call.1} parent=43 // pred_check_branch
          %1173 = sbr.rel (%p1171) target = $region67
        $region66: #{tpu_custom_call.1} parent=43 // pred_region
          #allocation18 [shape = 'u32[6]{0}', space=smem, size = 0x18, scoped, tag = 'DMA stride descriptor']
          %s1174 = smul.u32 2, %s30
          %s1176 = ssub.s32 1024, 1024
          %1177 = vsyncadd %s1123, %s1176
          %s1178 = smul.addr %s1174, 64
          %s1179 = scalar_lea.hbm %s7, %s1178
          %s1181 = sshll.u32 1, 14
          %s1182 = sxor.u32 4294967295, %s1181
          %s1185 = sshll.u32 7, 18
          %s1186 = sxor.u32 4294967295, %s1185
          %s1187 = sand.u32 0, %s1186
          %s1189 = sor.u32 %s1187, 0
          %s1190 = sshll.u32 %s1126, 4
          %s1191 = int_to_ptr.vmem [resolvable:$true] %s1190
          %1197 = sst [smem:[#allocation18]] 128
          %s1198 = scalar_lea.smem [#allocation18], 1
          %1199 = sst [smem:[%s1198]] 256
          %s1200 = scalar_lea.smem [#allocation18], 2
          %1201 = sst [smem:[%s1200]] 2
          %s1202 = scalar_lea.smem [#allocation18], 3
          %1203 = sst [smem:[%s1202]] 64
          %s1204 = scalar_lea.smem [#allocation18], 4
          %1205 = sst [smem:[%s1204]] 64
          %s1206 = scalar_lea.smem [#allocation18], 5
          %1207 = sst [smem:[%s1206]] 4
          %1209 = dma.general %s1191, 1024, %s1179, %s1123, 131072, [#allocation18], %s1189, 0
        $region67: #{tpu_custom_call.1} parent=43 // pred_fallthru
          _
        // Predicated region
        $region68: #{tpu_custom_call.1} parent=43 // pred_check
          %p1210 = pneg %p236
        $region69: #{tpu_custom_call.1} parent=43 // pred_check_branch
          %1212 = sbr.rel (%p1210) target = $region71
        $region70: #{tpu_custom_call.1} parent=43 // pred_region
          %s1213 = smul.u32 2, %s30
          %s1215 = ssub.s32 256, 256
          %1216 = vsyncadd %s1128, %s1215
          %s1217 = smul.addr %s1213, 128
          %s1218 = scalar_lea.hbm %s8, %s1217
          %s1219 = sshll.u32 %s1131, 4
          %s1220 = int_to_ptr.vmem [resolvable:$true] %s1219
          %1225 = dma.vmem_to_hbm [thread:$0]  %s1220, 256, %s1218, %s1128, 128, 128, 8
        $region71: #{tpu_custom_call.1} parent=43 // pred_fallthru
          _
      $region44: #{tpu_custom_call.1} parent=5 // pred_fallthru
        _
      %p1226 = scmp.le.s32.totalorder 2, %s25
      // Predicated region
      $region72: #{tpu_custom_call.1} parent=5 // pred_check
        %p1227 = pneg %p1226
      $region73: #{tpu_custom_call.1} parent=5 // pred_check_branch
        %1229 = sbr.rel (%p1227) target = $region75
      $region74: #{tpu_custom_call.1} parent=5 // pred_region
        %s1230 = ssub.s32 %s25, 2
        // Predicated region
        $region76: #{tpu_custom_call.1} parent=74 // pred_check
          %p1231 = pneg %p190
        $region77: #{tpu_custom_call.1} parent=74 // pred_check_branch
          %1233 = sbr.rel (%p1231) target = $region79
        $region78: #{tpu_custom_call.1} parent=74 // pred_region
          %s1234 = sand.u32 %s175, 1
          %s1235 = scalar_lea.sflag [#allocation6], %s1234
          %s1236 = sand.u32 %s175, 1
          %s1237 = smul.addr %s1236, 64
          %s1238 = scalar_lea.vmem [#allocation9], %s1237
          %1239 = dma.done %s1235, 1024
        $region79: #{tpu_custom_call.1} parent=74 // pred_fallthru
          _
        // Predicated region
        $region80: #{tpu_custom_call.1} parent=74 // pred_check
          %p1240 = pneg %p216
        $region81: #{tpu_custom_call.1} parent=74 // pred_check_branch
          %1242 = sbr.rel (%p1240) target = $region83
        $region82: #{tpu_custom_call.1} parent=74 // pred_region
          %s1243 = sand.u32 %s31, 1
          %s1244 = scalar_lea.sflag [#allocation11], %s1243
          %s1245 = sand.u32 %s201, 1
          %s1246 = smul.addr %s1245, 64
          %s1247 = scalar_lea.vmem [#allocation10], %s1246
          %1248 = dma.done %s1244, 1024
        $region83: #{tpu_custom_call.1} parent=74 // pred_fallthru
          _
        // Predicated region
        $region84: #{tpu_custom_call.1} parent=74 // pred_check
          %p1249 = pneg %p242
        $region85: #{tpu_custom_call.1} parent=74 // pred_check_branch
          %1251 = sbr.rel (%p1249) target = $region87
        $region86: #{tpu_custom_call.1} parent=74 // pred_region
          %s1252 = sand.u32 %s31, 1
          %s1253 = scalar_lea.sflag [#allocation11], %s1252
          %s1254 = sand.u32 %s227, 1
          %s1255 = smul.addr %s1254, 16
          %s1256 = scalar_lea.vmem [#allocation12], %s1255
          %1257 = dma.done %s1253, 256
        $region87: #{tpu_custom_call.1} parent=74 // pred_fallthru
          _
      $region75: #{tpu_custom_call.1} parent=5 // pred_fallthru
        _
    $region6: #{tpu_custom_call.1} parent=1 // loop_footer
      %s29 = sadd.s32 1, %s25
    $region7: #{tpu_custom_call.1} parent=1 // loop_footer_branch
      %24 = sbr.rel target = $region3
    $region8: #{tpu_custom_call.1} parent=1 // loop_exit
      _
    %1258 = vsyncpa [#allocation5], 1
    %s1259 = scalar_lea.sflag [#allocation5], 1
    %1260 = vsyncpa %s1259, 1
    %1261 = vsyncpa [#allocation8], 1
    %1262 = vsyncpa [#allocation6], 1
    %s1263 = scalar_lea.sflag [#allocation6], 1
    %1264 = vsyncpa %s1263, 1
    %1265 = vsyncpa [#allocation11], 1
    %s1266 = scalar_lea.sflag [#allocation11], 1
    %1267 = vsyncpa %s1266, 1

</llo_original>
